<compile_context>
chip_gen: v7x
topology: tpu7x:2x2x1
jax: 0.10.0
libtpu: 0.0.40
codegen_flags: <defaults>
</compile_context>

<pallas_src>
import jax
import jax.numpy as jnp
from jax import lax
from jax.experimental import pallas as pl
from jax.experimental.pallas import tpu as pltpu


# Flip on v6e/v7x for peak MXU rate (bf16 operands, f32 accumulation) on the
# projection / recurrent / decoder matmuls; gate nonlinearities and the cell
# state stay f32 (mandatory on v5e, which has no bf16 VPU/EUP).  Left off by
# default so the f32 reference check stays tight; __main__ loosens the
# tolerance automatically when enabled.
USE_BF16_MXU = False


def _mxu(x):
    return x.astype(jnp.bfloat16) if USE_BF16_MXU else x


def _vmem_capacity_bytes():
    try:
        return int(pltpu.get_tpu_info().vmem_capacity_bytes)
    except Exception:
        return 64 * 1024 * 1024            # conservative default (v7x per-core)


def _pick_nb_tile(nb, cap):
    """Largest divisor of nb that is <= cap and sublane-aligned (multiple of 8);
    falls back to the full extent, which is always a legal block shape."""
    cap = max(1, min(nb, cap))
    if nb <= cap:
        return nb
    for t in range(cap - cap % 8, 7, -8):
        if nb % t == 0:
            return t
    return nb


# ----------------------------------------------------------------------------
# Single fused kernel: BiLSTM encoder + token-sum + decoder.
# ----------------------------------------------------------------------------
def _fused_kernel(x_ref, wih_f_ref, wih_b_ref, bias_f_ref, bias_b_ref,
                  whh_f_ref, whh_b_ref, wd1_ref, bd1_ref, wd2_ref, bd2_ref,
                  out_ref,
                  xpf_ref, xpb_ref, of_ref, ob_ref, accf_ref, accb_ref):
    T, Nb, E = x_ref.shape
    H2 = whh_f_ref.shape[0]
    G = 4 * H2
    tile_idx = pl.program_id(0)

    # Token-sum accumulators persist across the Nb (token) grid axis.
    @pl.when(tile_idx == 0)
    def _():
        accf_ref[...] = jnp.zeros_like(accf_ref)
        accb_ref[...] = jnp.zeros_like(accb_ref)

    # Hoisted input-to-hidden projection: one matmul per direction, written
    # straight into its scratch buffer (input + hidden biases folded in).
    # Keeps the 2*T tiny matmuls off the serial critical path and avoids the
    # (T, Nb, 8*H2) transient / lane-sliced split of a fused-weight variant.
    x_flat = x_ref[...].reshape(T * Nb, E)
    xpf_ref[...] = (jnp.dot(_mxu(x_flat), _mxu(wih_f_ref[...]),
                            preferred_element_type=jnp.float32)
                    + bias_f_ref[...]).reshape(T, Nb, G)
    xpb_ref[...] = (jnp.dot(_mxu(x_flat), _mxu(wih_b_ref[...]),
                            preferred_element_type=jnp.float32)
                    + bias_b_ref[...]).reshape(T, Nb, G)

    whh_f = _mxu(whh_f_ref[...])
    whh_b = _mxu(whh_b_ref[...])

    def cell(pre, h, c, whh):
        gates = pre + jnp.dot(_mxu(h), whh, preferred_element_type=jnp.float32)
        # NOTE: for deployed sizes with H2 % 128 == 0 these lane slices are free
        # vreg views; for sub-128 H2 a per-gate 128-lane padded layout would
        # remove the masked slices (not worth it at the tiny sizes used here).
        i = jax.nn.sigmoid(gates[:, 0 * H2:1 * H2])
        f = jax.nn.sigmoid(gates[:, 1 * H2:2 * H2])
        g = jnp.tanh(gates[:, 2 * H2:3 * H2])
        o = jax.nn.sigmoid(gates[:, 3 * H2:4 * H2])
        c_new = f * c + i * g
        return o * jnp.tanh(c_new), c_new

    def step(t, carry):
        h_f, c_f, h_b, c_b = carry
        s = T - 1 - t
        # Both directions fused in one body: the two recurrent matmuls are
        # independent, giving the scheduler ILP to hide MXU/EUP latency.
        h_f, c_f = cell(xpf_ref[t], h_f, c_f, whh_f)
        h_b, c_b = cell(xpb_ref[s], h_b, c_b, whh_b)
        of_ref[t] = h_f
        ob_ref[s] = h_b
        return h_f, c_f, h_b, c_b

    z = jnp.zeros((Nb, H2), jnp.float32)
    # Partial unroll keeps LLO scheduling visibility with bounded code size.
    lax.fori_loop(0, T, step, (z, z, z, z), unroll=min(T, 8))

    # Per-example sum over this tile's token rows: one bulk reduce outside the
    # serial loop, accumulated across Nb tiles.
    accf_ref[...] += jnp.sum(of_ref[...], axis=1)
    accb_ref[...] += jnp.sum(ob_ref[...], axis=1)

    # Finalize on the last token tile.
    # TODO(synk): DependencyCRF argmax/marginals (torch_struct inside-outside)
    # has no Pallas equivalent; it is also irrelevant to the output here —
    # any unit-row-sum parser output (argmax tree / marginals / the softmax
    # surrogate used by the reference) makes the module's
    # einsum('bnm,bnh->bnh') return enc unchanged, and the attn softmax is
    # over a size-1 axis, so tree_representation == concat([sum_enc, sum_enc]).
    @pl.when(tile_idx == pl.num_programs(0) - 1)
    def _():
        sum_enc = jnp.concatenate([accf_ref[...], accb_ref[...]], axis=-1)
        tree_rep = jnp.concatenate([sum_enc, sum_enc], axis=-1)      # (T, 2H)
        h1 = jnp.maximum(
            jnp.dot(_mxu(tree_rep), _mxu(wd1_ref[...]),
                    preferred_element_type=jnp.float32) + bd1_ref[...], 0.0)
        out_ref[...] = (jnp.dot(_mxu(h1), _mxu(wd2_ref[...]),
                                preferred_element_type=jnp.float32)
                        + bd2_ref[...])


def lstm_classifier(x, p):
    """x: (T, Nb, E) embedded inputs; T is the seq-first recurrence axis
    (PyTorch nn.LSTM default), Nb is the LSTM batch / classifier token axis.
    Returns (T, n_classes) logits (== (B, n_classes) for this module)."""
    T, Nb, E = x.shape
    H2 = p['whh_f'].shape[1]
    G = 4 * H2
    Ho = p['d_w1'].shape[0]
    C = p['d_w2'].shape[0]

    # Dropping attn_query is valid only because attention_hidden_size == 1
    # (softmax over a size-1 axis is exactly 1.0) — guard so a config change
    # fails loudly instead of silently diverging.
    assert p['q_w'].shape[0] == 1, "attention_hidden_size != 1 not supported"

    weights = (
        p['wih_f'].T,                                  # (E, G)
        p['wih_b'].T,                                  # (E, G)
        (p['bih_f'] + p['bhh_f']).reshape(1, G),       # (1, G)
        (p['bih_b'] + p['bhh_b']).reshape(1, G),       # (1, G)
        p['whh_f'].T,                                  # (H2, G)
        p['whh_b'].T,                                  # (H2, G)
        p['d_w1'].T,                                   # (2H, Ho)
        p['d_b1'].reshape(1, Ho),                      # (1, Ho)
        p['d_w2'].T,                                   # (Ho, C)
        p['d_b2'].reshape(1, C),                       # (1, C)
    )

    # Per-chip sizing: largest sublane-aligned Nb tile whose per-row footprint
    # (double-buffered input block + xp / out scratch) fits ~half the chip's
    # VMEM, capped at 128 rows to bound vreg/VMEM pressure inside the serial
    # recurrence.  vmem_limit_bytes derived from capacity (v7x 64 MiB vs
    # v5e/v6e 128 MiB) instead of a hard-coded constant.
    cap = _vmem_capacity_bytes()
    w_bytes = 2 * sum(4 * int(w.size) for w in weights)
    per_row = 4 * T * (2 * E + 2 * G + 2 * H2)
    budget = max(cap // 2 - w_bytes, 8 * per_row)
    nb_tile = _pick_nb_tile(Nb, min(128, budget // per_row))
    vmem_limit = min(cap * 3 // 4, 100 * 1024 * 1024)

    return pl.pallas_call(
        _fused_kernel,
        out_shape=jax.ShapeDtypeStruct((T, C), jnp.float32),
        grid=(Nb // nb_tile,),
        in_specs=[pl.BlockSpec((T, nb_tile, E), lambda i: (0, i, 0))]
                 + [pl.BlockSpec(w.shape, lambda i: (0, 0)) for w in weights],
        out_specs=pl.BlockSpec((T, C), lambda i: (0, 0)),
        scratch_shapes=[pltpu.VMEM((T, nb_tile, G), jnp.float32),    # xp fwd
                        pltpu.VMEM((T, nb_tile, G), jnp.float32),    # xp bwd
                        pltpu.VMEM((T, nb_tile, H2), jnp.float32),   # out fwd
                        pltpu.VMEM((T, nb_tile, H2), jnp.float32),   # out bwd
                        pltpu.VMEM((T, H2), jnp.float32),            # token-sum fwd
                        pltpu.VMEM((T, H2), jnp.float32)],           # token-sum bwd
        compiler_params=pltpu.CompilerParams(
            # The Nb (token) axis is a reduction into the fused classifier, so
            # it is "arbitrary".  A v7x megacore split would require keeping
            # the token sum outside the kernel (re-introducing the (B, N, H)
            # HBM round trip), which costs more than the lost 2x here.
            dimension_semantics=("arbitrary",),
            vmem_limit_bytes=vmem_limit),
    )(x, *weights)


# ----------------------------------------------------------------------------
# Full forward (embedding gather is glue in plain JAX).
# ----------------------------------------------------------------------------
def latent_syntax_classifier_forward(inputs, params):
    embedded = jnp.take(params['emb'], inputs, axis=0)    # (B, N, E)
    return lstm_classifier(embedded, params)              # (B, n_classes)


# ----------------------------------------------------------------------------
# Pure-JAX reference (computes the FULL biaffine / softmax / attention path, so
# the allclose check validates the algebraic elision in the kernel).
# ----------------------------------------------------------------------------
def _reference_forward(inputs, p):
    emb = p['emb'][inputs]                                # (B, N, E)

    def lstm_dir(x, wih, whh, bih, bhh, reverse):
        H2 = whh.shape[1]

        def cell(carry, x_t):
            h, c = carry
            gates = x_t @ wih.T + bih + h @ whh.T + bhh
            i, f, g, o = jnp.split(gates, 4, axis=-1)
            i, f, o = jax.nn.sigmoid(i), jax.nn.sigmoid(f), jax.nn.sigmoid(o)
            g = jnp.tanh(g)
            c = f * c + i * g
            h = o * jnp.tanh(c)
            return (h, c), h

        h0 = jnp.zeros((x.shape[1], H2), jnp.float32)
        xs = x[::-1] if reverse else x
        _, hs = lax.scan(cell, (h0, jnp.zeros_like(h0)), xs)
        return hs[::-1] if reverse else hs

    out_f = lstm_dir(emb, p['wih_f'], p['whh_f'], p['bih_f'], p['bhh_f'], False)
    out_b = lstm_dir(emb, p['wih_b'], p['whh_b'], p['bih_b'], p['bhh_b'], True)
    enc = jnp.concatenate([out_f, out_b], axis=-1)        # (B, N, H)

    n = enc.shape[1]
    X1 = jnp.repeat(enc[:, None], n, axis=1)
    X2 = jnp.repeat(enc[:, :, None], n, axis=2)
    arc_vectors = jnp.concatenate(
        [jnp.swapaxes(X1, 1, 2), jnp.swapaxes(X2, 1, 2)], axis=3)
    hidden = jnp.tanh(arc_vectors @ p['p_w1'].T + p['p_b1'])
    arc = (hidden @ p['p_w2'].T + p['p_b2'])[..., 0]
    P = jax.nn.softmax(arc, axis=-1)                      # surrogate parser output
    avg_heads = jnp.einsum('bnm,bnh->bnh', P, enc)
    tree = jnp.concatenate([enc, avg_heads], axis=2)
    attn_scores = tree @ p['q_w'].T + p['q_b']
    attn_proba = jax.nn.softmax(attn_scores, axis=-1)
    tree_rep = jnp.einsum('bnm,bnh->bm', tree, attn_proba)
    h1 = jax.nn.relu(tree_rep @ p['d_w1'].T + p['d_b1'])
    return h1 @ p['d_w2'].T + p['d_b2']


# ----------------------------------------------------------------------------
# Deterministic parameter init (shapes from LatentSyntaxClassifier.__init__).
# ----------------------------------------------------------------------------
def init_params(key, vocab, E, H, Ho, C):
    H2 = H // 2
    ks = jax.random.split(key, 18)

    def u(k, shape, s=0.1):
        return jax.random.uniform(k, shape, jnp.float32, -s, s)

    return dict(
        emb=u(ks[0], (vocab, E), 1.0),
        wih_f=u(ks[1], (4 * H2, E)), whh_f=u(ks[2], (4 * H2, H2)),
        bih_f=u(ks[3], (4 * H2,)), bhh_f=u(ks[4], (4 * H2,)),
        wih_b=u(ks[5], (4 * H2, E)), whh_b=u(ks[6], (4 * H2, H2)),
        bih_b=u(ks[7], (4 * H2,)), bhh_b=u(ks[8], (4 * H2,)),
        p_w1=u(ks[9], (H, 2 * H)), p_b1=u(ks[10], (H,)),
        p_w2=u(ks[11], (1, H)), p_b2=u(ks[12], (1,)),
        q_w=u(ks[13], (1, 2 * H)), q_b=u(ks[14], (1,)),
        d_w1=u(ks[15], (Ho, 2 * H)), d_b1=u(ks[16], (Ho,)),
        d_w2=u(ks[17], (C, Ho)), d_b2=jnp.zeros((C,), jnp.float32),
    )


if __name__ == "__main__":
    vocab, E, H, Ho, C = 50, 32, 32, 16, 4     # embedding, hidden, hidden_out, n_classes
    B, N = 2, 8                                # batch, sequence length
    key = jax.random.PRNGKey(0)
    k_p, k_in = jax.random.split(key)
    params = init_params(k_p, vocab, E, H, Ho, C)
    inputs = jax.random.randint(k_in, (B, N), 0, vocab, dtype=jnp.int32)

    out = jax.block_until_ready(latent_syntax_classifier_forward(inputs, params))
    assert out.shape == (B, C) and out.dtype == jnp.float32

    ref = _reference_forward(inputs, params)
    tol = 2e-2 if USE_BF16_MXU else 1e-3
    assert jnp.allclose(out, ref, rtol=tol, atol=tol), (out, ref)
    print("KERNEL_OK")
</pallas_src>

<mosaic_0001>
module attributes {stable_mosaic.version = 11 : i64} {
  func.func @_fused_kernel(%arg0: i32, %arg1: memref<2x8x32xf32, #tpu.memory_space<vmem>>, %arg2: memref<32x64xf32, #tpu.memory_space<vmem>>, %arg3: memref<32x64xf32, #tpu.memory_space<vmem>>, %arg4: memref<1x64xf32, #tpu.memory_space<vmem>>, %arg5: memref<1x64xf32, #tpu.memory_space<vmem>>, %arg6: memref<16x64xf32, #tpu.memory_space<vmem>>, %arg7: memref<16x64xf32, #tpu.memory_space<vmem>>, %arg8: memref<64x16xf32, #tpu.memory_space<vmem>>, %arg9: memref<1x16xf32, #tpu.memory_space<vmem>>, %arg10: memref<16x4xf32, #tpu.memory_space<vmem>>, %arg11: memref<1x4xf32, #tpu.memory_space<vmem>>, %arg12: memref<2x4xf32, #tpu.memory_space<vmem>>, %arg13: memref<2x8x64xf32, #tpu.memory_space<vmem>>, %arg14: memref<2x8x64xf32, #tpu.memory_space<vmem>>, %arg15: memref<2x8x16xf32, #tpu.memory_space<vmem>>, %arg16: memref<2x8x16xf32, #tpu.memory_space<vmem>>, %arg17: memref<2x16xf32, #tpu.memory_space<vmem>>, %arg18: memref<2x16xf32, #tpu.memory_space<vmem>>) attributes {dimension_semantics = [#tpu.dimension_semantics<arbitrary>], iteration_bounds = array<i64: 1>, scalar_prefetch = 0 : i64, scratch_operands = 6 : i64, tpu.core_type = #tpu.core_type<tc>, window_params = [{transform_indices = @transform_0, window_bounds = array<i64: 2, 8, 32>}, {pipeline_mode = #tpu.pipeline_mode<synchronous>, transform_indices = @transform_1, window_bounds = array<i64: 32, 64>}, {pipeline_mode = #tpu.pipeline_mode<synchronous>, transform_indices = @transform_2, window_bounds = array<i64: 32, 64>}, {pipeline_mode = #tpu.pipeline_mode<synchronous>, transform_indices = @transform_3, window_bounds = array<i64: 1, 64>}, {pipeline_mode = #tpu.pipeline_mode<synchronous>, transform_indices = @transform_4, window_bounds = array<i64: 1, 64>}, {pipeline_mode = #tpu.pipeline_mode<synchronous>, transform_indices = @transform_5, window_bounds = array<i64: 16, 64>}, {pipeline_mode = #tpu.pipeline_mode<synchronous>, transform_indices = @transform_6, window_bounds = array<i64: 16, 64>}, {pipeline_mode = #tpu.pipeline_mode<synchronous>, transform_indices = @transform_7, window_bounds = array<i64: 64, 16>}, {pipeline_mode = #tpu.pipeline_mode<synchronous>, transform_indices = @transform_8, window_bounds = array<i64: 1, 16>}, {pipeline_mode = #tpu.pipeline_mode<synchronous>, transform_indices = @transform_9, window_bounds = array<i64: 16, 4>}, {pipeline_mode = #tpu.pipeline_mode<synchronous>, transform_indices = @transform_10, window_bounds = array<i64: 1, 4>}, {pipeline_mode = #tpu.pipeline_mode<synchronous>, transform_indices = @transform_11, window_bounds = array<i64: 2, 4>}]} {
    %c0_i32 = arith.constant 0 : i32
    %0 = arith.cmpi eq, %arg0, %c0_i32 : i32
    %1 = arith.extui %0 : i1 to i32
    %c0_i32_0 = arith.constant 0 : i32
    %2 = arith.cmpi ne, %1, %c0_i32_0 : i32
    scf.if %2 {
      %cst_76 = arith.constant 0.000000e+00 : f32
      %173 = vector.broadcast %cst_76 : f32 to vector<2x16xf32>
      %c0_77 = arith.constant 0 : index
      %c0_78 = arith.constant 0 : index
      %174 = vector.load %arg17[%c0_77, %c0_78] : memref<2x16xf32, #tpu.memory_space<vmem>>, vector<2x16xf32>
      tpu.vector_store %arg17[%c0_77, %c0_78], %173 {strides = array<i32>} : memref<2x16xf32, #tpu.memory_space<vmem>>, vector<2x16xf32>,
      %cst_79 = arith.constant 0.000000e+00 : f32
      %175 = vector.broadcast %cst_79 : f32 to vector<2x16xf32>
      %c0_80 = arith.constant 0 : index
      %c0_81 = arith.constant 0 : index
      %176 = vector.load %arg18[%c0_80, %c0_81] : memref<2x16xf32, #tpu.memory_space<vmem>>, vector<2x16xf32>
      tpu.vector_store %arg18[%c0_80, %c0_81], %175 {strides = array<i32>} : memref<2x16xf32, #tpu.memory_space<vmem>>, vector<2x16xf32>,
    } else {
    }
    %c0 = arith.constant 0 : index
    %c0_1 = arith.constant 0 : index
    %c0_2 = arith.constant 0 : index
    %3 = vector.load %arg1[%c0, %c0_1, %c0_2] : memref<2x8x32xf32, #tpu.memory_space<vmem>>, vector<2x8x32xf32>
    %4 = vector.shape_cast %3 : vector<2x8x32xf32> to vector<16x32xf32>
    %c0_3 = arith.constant 0 : index
    %c0_4 = arith.constant 0 : index
    %5 = vector.load %arg2[%c0_3, %c0_4] : memref<32x64xf32, #tpu.memory_space<vmem>>, vector<32x64xf32>
    %cst = arith.constant dense<0.000000e+00> : vector<16x64xf32>
    %6 = tpu.matmul %4, %5, %cst {dimension_numbers = #tpu.dot_dimension_numbers<[1], [0], [0], [1], [0, 0, 1, 1], [], []>} : vector<16x32xf32>, vector<32x64xf32>, vector<16x64xf32> -> vector<16x64xf32>
    %c0_5 = arith.constant 0 : index
    %c0_6 = arith.constant 0 : index
    %7 = vector.load %arg4[%c0_5, %c0_6] : memref<1x64xf32, #tpu.memory_space<vmem>>, vector<1x64xf32>
    %8 = vector.broadcast %7 : vector<1x64xf32> to vector<16x64xf32>
    %9 = arith.addf %6, %8 : vector<16x64xf32>
    %10 = vector.shape_cast %9 : vector<16x64xf32> to vector<2x8x64xf32>
    %c0_7 = arith.constant 0 : index
    %c0_8 = arith.constant 0 : index
    %c0_9 = arith.constant 0 : index
    %11 = vector.load %arg13[%c0_7, %c0_8, %c0_9] : memref<2x8x64xf32, #tpu.memory_space<vmem>>, vector<2x8x64xf32>
    tpu.vector_store %arg13[%c0_7, %c0_8, %c0_9], %10 {strides = array<i32>} : memref<2x8x64xf32, #tpu.memory_space<vmem>>, vector<2x8x64xf32>,
    %c0_10 = arith.constant 0 : index
    %c0_11 = arith.constant 0 : index
    %12 = vector.load %arg3[%c0_10, %c0_11] : memref<32x64xf32, #tpu.memory_space<vmem>>, vector<32x64xf32>
    %cst_12 = arith.constant dense<0.000000e+00> : vector<16x64xf32>
    %13 = tpu.matmul %4, %12, %cst_12 {dimension_numbers = #tpu.dot_dimension_numbers<[1], [0], [0], [1], [0, 0, 1, 1], [], []>} : vector<16x32xf32>, vector<32x64xf32>, vector<16x64xf32> -> vector<16x64xf32>
    %c0_13 = arith.constant 0 : index
    %c0_14 = arith.constant 0 : index
    %14 = vector.load %arg5[%c0_13, %c0_14] : memref<1x64xf32, #tpu.memory_space<vmem>>, vector<1x64xf32>
    %15 = vector.broadcast %14 : vector<1x64xf32> to vector<16x64xf32>
    %16 = arith.addf %13, %15 : vector<16x64xf32>
    %17 = vector.shape_cast %16 : vector<16x64xf32> to vector<2x8x64xf32>
    %c0_15 = arith.constant 0 : index
    %c0_16 = arith.constant 0 : index
    %c0_17 = arith.constant 0 : index
    %18 = vector.load %arg14[%c0_15, %c0_16, %c0_17] : memref<2x8x64xf32, #tpu.memory_space<vmem>>, vector<2x8x64xf32>
    tpu.vector_store %arg14[%c0_15, %c0_16, %c0_17], %17 {strides = array<i32>} : memref<2x8x64xf32, #tpu.memory_space<vmem>>, vector<2x8x64xf32>,
    %c0_18 = arith.constant 0 : index
    %c0_19 = arith.constant 0 : index
    %19 = vector.load %arg6[%c0_18, %c0_19] : memref<16x64xf32, #tpu.memory_space<vmem>>, vector<16x64xf32>
    %c0_20 = arith.constant 0 : index
    %c0_21 = arith.constant 0 : index
    %20 = vector.load %arg7[%c0_20, %c0_21] : memref<16x64xf32, #tpu.memory_space<vmem>>, vector<16x64xf32>
    %cst_22 = arith.constant 0.000000e+00 : f32
    %21 = vector.broadcast %cst_22 : f32 to vector<8x16xf32>
    %c0_i32_23 = arith.constant 0 : i32
    %c1_i32 = arith.constant 1 : i32
    %22 = arith.subi %c1_i32, %c0_i32_23 : i32
    %23 = arith.index_cast %c0_i32_23 : i32 to index
    %c0_24 = arith.constant 0 : index
    %c0_25 = arith.constant 0 : index
    %24 = vector.load %arg13[%23, %c0_24, %c0_25] : memref<2x8x64xf32, #tpu.memory_space<vmem>>, vector<1x8x64xf32>
    %25 = vector.shape_cast %24 : vector<1x8x64xf32> to vector<8x64xf32>
    %cst_26 = arith.constant dense<0.000000e+00> : vector<8x64xf32>
    %26 = tpu.matmul %21, %19, %cst_26 {dimension_numbers = #tpu.dot_dimension_numbers<[1], [0], [0], [1], [0, 0, 1, 1], [], []>} : vector<8x16xf32>, vector<16x64xf32>, vector<8x64xf32> -> vector<8x64xf32>
    %27 = arith.addf %25, %26 : vector<8x64xf32>
    %28 = vector.extract_strided_slice %27 {offsets = [0, 0], sizes = [8, 16], strides = [1, 1]} : vector<8x64xf32> to vector<8x16xf32>
    %29 = arith.negf %28 : vector<8x16xf32>
    %30 = math.exp %29 : vector<8x16xf32>
    %cst_27 = arith.constant 1.000000e+00 : f32
    %31 = vector.broadcast %cst_27 : f32 to vector<8x16xf32>
    %32 = arith.addf %31, %30 : vector<8x16xf32>
    %33 = arith.divf %31, %32 : vector<8x16xf32>
    %34 = vector.extract_strided_slice %27 {offsets = [0, 16], sizes = [8, 16], strides = [1, 1]} : vector<8x64xf32> to vector<8x16xf32>
    %35 = arith.negf %34 : vector<8x16xf32>
    %36 = math.exp %35 : vector<8x16xf32>
    %cst_28 = arith.constant 1.000000e+00 : f32
    %37 = vector.broadcast %cst_28 : f32 to vector<8x16xf32>
    %38 = arith.addf %37, %36 : vector<8x16xf32>
    %39 = arith.divf %37, %38 : vector<8x16xf32>
    %40 = vector.extract_strided_slice %27 {offsets = [0, 32], sizes = [8, 16], strides = [1, 1]} : vector<8x64xf32> to vector<8x16xf32>
    %41 = math.tanh %40 : vector<8x16xf32>
    %42 = vector.extract_strided_slice %27 {offsets = [0, 48], sizes = [8, 16], strides = [1, 1]} : vector<8x64xf32> to vector<8x16xf32>
    %43 = arith.negf %42 : vector<8x16xf32>
    %44 = math.exp %43 : vector<8x16xf32>
    %cst_29 = arith.constant 1.000000e+00 : f32
    %45 = vector.broadcast %cst_29 : f32 to vector<8x16xf32>
    %46 = arith.addf %45, %44 : vector<8x16xf32>
    %47 = arith.divf %45, %46 : vector<8x16xf32>
    %48 = arith.mulf %39, %21 : vector<8x16xf32>
    %49 = arith.mulf %33, %41 : vector<8x16xf32>
    %50 = arith.addf %48, %49 : vector<8x16xf32>
    %51 = math.tanh %50 : vector<8x16xf32>
    %52 = arith.mulf %47, %51 : vector<8x16xf32>
    %53 = arith.index_cast %22 : i32 to index
    %c0_30 = arith.constant 0 : index
    %c0_31 = arith.constant 0 : index
    %54 = vector.load %arg14[%53, %c0_30, %c0_31] : memref<2x8x64xf32, #tpu.memory_space<vmem>>, vector<1x8x64xf32>
    %55 = vector.shape_cast %54 : vector<1x8x64xf32> to vector<8x64xf32>
    %cst_32 = arith.constant dense<0.000000e+00> : vector<8x64xf32>
    %56 = tpu.matmul %21, %20, %cst_32 {dimension_numbers = #tpu.dot_dimension_numbers<[1], [0], [0], [1], [0, 0, 1, 1], [], []>} : vector<8x16xf32>, vector<16x64xf32>, vector<8x64xf32> -> vector<8x64xf32>
    %57 = arith.addf %55, %56 : vector<8x64xf32>
    %58 = vector.extract_strided_slice %57 {offsets = [0, 0], sizes = [8, 16], strides = [1, 1]} : vector<8x64xf32> to vector<8x16xf32>
    %59 = arith.negf %58 : vector<8x16xf32>
    %60 = math.exp %59 : vector<8x16xf32>
    %cst_33 = arith.constant 1.000000e+00 : f32
    %61 = vector.broadcast %cst_33 : f32 to vector<8x16xf32>
    %62 = arith.addf %61, %60 : vector<8x16xf32>
    %63 = arith.divf %61, %62 : vector<8x16xf32>
    %64 = vector.extract_strided_slice %57 {offsets = [0, 16], sizes = [8, 16], strides = [1, 1]} : vector<8x64xf32> to vector<8x16xf32>
    %65 = arith.negf %64 : vector<8x16xf32>
    %66 = math.exp %65 : vector<8x16xf32>
    %cst_34 = arith.constant 1.000000e+00 : f32
    %67 = vector.broadcast %cst_34 : f32 to vector<8x16xf32>
    %68 = arith.addf %67, %66 : vector<8x16xf32>
    %69 = arith.divf %67, %68 : vector<8x16xf32>
    %70 = vector.extract_strided_slice %57 {offsets = [0, 32], sizes = [8, 16], strides = [1, 1]} : vector<8x64xf32> to vector<8x16xf32>
    %71 = math.tanh %70 : vector<8x16xf32>
    %72 = vector.extract_strided_slice %57 {offsets = [0, 48], sizes = [8, 16], strides = [1, 1]} : vector<8x64xf32> to vector<8x16xf32>
    %73 = arith.negf %72 : vector<8x16xf32>
    %74 = math.exp %73 : vector<8x16xf32>
    %cst_35 = arith.constant 1.000000e+00 : f32
    %75 = vector.broadcast %cst_35 : f32 to vector<8x16xf32>
    %76 = arith.addf %75, %74 : vector<8x16xf32>
    %77 = arith.divf %75, %76 : vector<8x16xf32>
    %78 = arith.mulf %69, %21 : vector<8x16xf32>
    %79 = arith.mulf %63, %71 : vector<8x16xf32>
    %80 = arith.addf %78, %79 : vector<8x16xf32>
    %81 = math.tanh %80 : vector<8x16xf32>
    %82 = arith.mulf %77, %81 : vector<8x16xf32>
    %83 = arith.index_cast %c0_i32_23 : i32 to index
    %c0_36 = arith.constant 0 : index
    %c0_37 = arith.constant 0 : index
    %84 = vector.load %arg15[%83, %c0_36, %c0_37] : memref<2x8x16xf32, #tpu.memory_space<vmem>>, vector<1x8x16xf32>
    %85 = vector.shape_cast %84 : vector<1x8x16xf32> to vector<8x16xf32>
    %86 = vector.shape_cast %52 : vector<8x16xf32> to vector<1x8x16xf32>
    tpu.vector_store %arg15[%83, %c0_36, %c0_37], %86 {strides = array<i32>} : memref<2x8x16xf32, #tpu.memory_space<vmem>>, vector<1x8x16xf32>,
    %87 = arith.index_cast %22 : i32 to index
    %c0_38 = arith.constant 0 : index
    %c0_39 = arith.constant 0 : index
    %88 = vector.load %arg16[%87, %c0_38, %c0_39] : memref<2x8x16xf32, #tpu.memory_space<vmem>>, vector<1x8x16xf32>
    %89 = vector.shape_cast %88 : vector<1x8x16xf32> to vector<8x16xf32>
    %90 = vector.shape_cast %82 : vector<8x16xf32> to vector<1x8x16xf32>
    tpu.vector_store %arg16[%87, %c0_38, %c0_39], %90 {strides = array<i32>} : memref<2x8x16xf32, #tpu.memory_space<vmem>>, vector<1x8x16xf32>,
    %c1_i32_40 = arith.constant 1 : i32
    %c1_i32_41 = arith.constant 1 : i32
    %91 = arith.subi %c1_i32_41, %c1_i32_40 : i32
    %92 = arith.index_cast %c1_i32_40 : i32 to index
    %c0_42 = arith.constant 0 : index
    %c0_43 = arith.constant 0 : index
    %93 = vector.load %arg13[%92, %c0_42, %c0_43] : memref<2x8x64xf32, #tpu.memory_space<vmem>>, vector<1x8x64xf32>
    %94 = vector.shape_cast %93 : vector<1x8x64xf32> to vector<8x64xf32>
    %cst_44 = arith.constant dense<0.000000e+00> : vector<8x64xf32>
    %95 = tpu.matmul %52, %19, %cst_44 {dimension_numbers = #tpu.dot_dimension_numbers<[1], [0], [0], [1], [0, 0, 1, 1], [], []>} : vector<8x16xf32>, vector<16x64xf32>, vector<8x64xf32> -> vector<8x64xf32>
    %96 = arith.addf %94, %95 : vector<8x64xf32>
    %97 = vector.extract_strided_slice %96 {offsets = [0, 0], sizes = [8, 16], strides = [1, 1]} : vector<8x64xf32> to vector<8x16xf32>
    %98 = arith.negf %97 : vector<8x16xf32>
    %99 = math.exp %98 : vector<8x16xf32>
    %cst_45 = arith.constant 1.000000e+00 : f32
    %100 = vector.broadcast %cst_45 : f32 to vector<8x16xf32>
    %101 = arith.addf %100, %99 : vector<8x16xf32>
    %102 = arith.divf %100, %101 : vector<8x16xf32>
    %103 = vector.extract_strided_slice %96 {offsets = [0, 16], sizes = [8, 16], strides = [1, 1]} : vector<8x64xf32> to vector<8x16xf32>
    %104 = arith.negf %103 : vector<8x16xf32>
    %105 = math.exp %104 : vector<8x16xf32>
    %cst_46 = arith.constant 1.000000e+00 : f32
    %106 = vector.broadcast %cst_46 : f32 to vector<8x16xf32>
    %107 = arith.addf %106, %105 : vector<8x16xf32>
    %108 = arith.divf %106, %107 : vector<8x16xf32>
    %109 = vector.extract_strided_slice %96 {offsets = [0, 32], sizes = [8, 16], strides = [1, 1]} : vector<8x64xf32> to vector<8x16xf32>
    %110 = math.tanh %109 : vector<8x16xf32>
    %111 = vector.extract_strided_slice %96 {offsets = [0, 48], sizes = [8, 16], strides = [1, 1]} : vector<8x64xf32> to vector<8x16xf32>
    %112 = arith.negf %111 : vector<8x16xf32>
    %113 = math.exp %112 : vector<8x16xf32>
    %cst_47 = arith.constant 1.000000e+00 : f32
    %114 = vector.broadcast %cst_47 : f32 to vector<8x16xf32>
    %115 = arith.addf %114, %113 : vector<8x16xf32>
    %116 = arith.divf %114, %115 : vector<8x16xf32>
    %117 = arith.mulf %108, %50 : vector<8x16xf32>
    %118 = arith.mulf %102, %110 : vector<8x16xf32>
    %119 = arith.addf %117, %118 : vector<8x16xf32>
    %120 = math.tanh %119 : vector<8x16xf32>
    %121 = arith.mulf %116, %120 : vector<8x16xf32>
    %122 = arith.index_cast %91 : i32 to index
    %c0_48 = arith.constant 0 : index
    %c0_49 = arith.constant 0 : index
    %123 = vector.load %arg14[%122, %c0_48, %c0_49] : memref<2x8x64xf32, #tpu.memory_space<vmem>>, vector<1x8x64xf32>
    %124 = vector.shape_cast %123 : vector<1x8x64xf32> to vector<8x64xf32>
    %cst_50 = arith.constant dense<0.000000e+00> : vector<8x64xf32>
    %125 = tpu.matmul %82, %20, %cst_50 {dimension_numbers = #tpu.dot_dimension_numbers<[1], [0], [0], [1], [0, 0, 1, 1], [], []>} : vector<8x16xf32>, vector<16x64xf32>, vector<8x64xf32> -> vector<8x64xf32>
    %126 = arith.addf %124, %125 : vector<8x64xf32>
    %127 = vector.extract_strided_slice %126 {offsets = [0, 0], sizes = [8, 16], strides = [1, 1]} : vector<8x64xf32> to vector<8x16xf32>
    %128 = arith.negf %127 : vector<8x16xf32>
    %129 = math.exp %128 : vector<8x16xf32>
    %cst_51 = arith.constant 1.000000e+00 : f32
    %130 = vector.broadcast %cst_51 : f32 to vector<8x16xf32>
    %131 = arith.addf %130, %129 : vector<8x16xf32>
    %132 = arith.divf %130, %131 : vector<8x16xf32>
    %133 = vector.extract_strided_slice %126 {offsets = [0, 16], sizes = [8, 16], strides = [1, 1]} : vector<8x64xf32> to vector<8x16xf32>
    %134 = arith.negf %133 : vector<8x16xf32>
    %135 = math.exp %134 : vector<8x16xf32>
    %cst_52 = arith.constant 1.000000e+00 : f32
    %136 = vector.broadcast %cst_52 : f32 to vector<8x16xf32>
    %137 = arith.addf %136, %135 : vector<8x16xf32>
    %138 = arith.divf %136, %137 : vector<8x16xf32>
    %139 = vector.extract_strided_slice %126 {offsets = [0, 32], sizes = [8, 16], strides = [1, 1]} : vector<8x64xf32> to vector<8x16xf32>
    %140 = math.tanh %139 : vector<8x16xf32>
    %141 = vector.extract_strided_slice %126 {offsets = [0, 48], sizes = [8, 16], strides = [1, 1]} : vector<8x64xf32> to vector<8x16xf32>
    %142 = arith.negf %141 : vector<8x16xf32>
    %143 = math.exp %142 : vector<8x16xf32>
    %cst_53 = arith.constant 1.000000e+00 : f32
    %144 = vector.broadcast %cst_53 : f32 to vector<8x16xf32>
    %145 = arith.addf %144, %143 : vector<8x16xf32>
    %146 = arith.divf %144, %145 : vector<8x16xf32>
    %147 = arith.mulf %138, %80 : vector<8x16xf32>
    %148 = arith.mulf %132, %140 : vector<8x16xf32>
    %149 = arith.addf %147, %148 : vector<8x16xf32>
    %150 = math.tanh %149 : vector<8x16xf32>
    %151 = arith.mulf %146, %150 : vector<8x16xf32>
    %152 = arith.index_cast %c1_i32_40 : i32 to index
    %c0_54 = arith.constant 0 : index
    %c0_55 = arith.constant 0 : index
    %153 = vector.load %arg15[%152, %c0_54, %c0_55] : memref<2x8x16xf32, #tpu.memory_space<vmem>>, vector<1x8x16xf32>
    %154 = vector.shape_cast %153 : vector<1x8x16xf32> to vector<8x16xf32>
    %155 = vector.shape_cast %121 : vector<8x16xf32> to vector<1x8x16xf32>
    tpu.vector_store %arg15[%152, %c0_54, %c0_55], %155 {strides = array<i32>} : memref<2x8x16xf32, #tpu.memory_space<vmem>>, vector<1x8x16xf32>,
    %156 = arith.index_cast %91 : i32 to index
    %c0_56 = arith.constant 0 : index
    %c0_57 = arith.constant 0 : index
    %157 = vector.load %arg16[%156, %c0_56, %c0_57] : memref<2x8x16xf32, #tpu.memory_space<vmem>>, vector<1x8x16xf32>
    %158 = vector.shape_cast %157 : vector<1x8x16xf32> to vector<8x16xf32>
    %159 = vector.shape_cast %151 : vector<8x16xf32> to vector<1x8x16xf32>
    tpu.vector_store %arg16[%156, %c0_56, %c0_57], %159 {strides = array<i32>} : memref<2x8x16xf32, #tpu.memory_space<vmem>>, vector<1x8x16xf32>,
    %c2_i32 = arith.constant 2 : i32
    %c0_58 = arith.constant 0 : index
    %c0_59 = arith.constant 0 : index
    %160 = vector.load %arg17[%c0_58, %c0_59] : memref<2x16xf32, #tpu.memory_space<vmem>>, vector<2x16xf32>
    %c0_60 = arith.constant 0 : index
    %c0_61 = arith.constant 0 : index
    %c0_62 = arith.constant 0 : index
    %161 = vector.load %arg15[%c0_60, %c0_61, %c0_62] : memref<2x8x16xf32, #tpu.memory_space<vmem>>, vector<2x8x16xf32>
    %cst_63 = arith.constant dense<0.000000e+00> : vector<2x16xf32>
    %162 = vector.multi_reduction <add>, %161, %cst_63 [1] : vector<2x8x16xf32> to vector<2x16xf32>
    %163 = arith.addf %160, %162 : vector<2x16xf32>
    %c0_64 = arith.constant 0 : index
    %c0_65 = arith.constant 0 : index
    %164 = vector.load %arg17[%c0_64, %c0_65] : memref<2x16xf32, #tpu.memory_space<vmem>>, vector<2x16xf32>
    tpu.vector_store %arg17[%c0_64, %c0_65], %163 {strides = array<i32>} : memref<2x16xf32, #tpu.memory_space<vmem>>, vector<2x16xf32>,
    %c0_66 = arith.constant 0 : index
    %c0_67 = arith.constant 0 : index
    %165 = vector.load %arg18[%c0_66, %c0_67] : memref<2x16xf32, #tpu.memory_space<vmem>>, vector<2x16xf32>
    %c0_68 = arith.constant 0 : index
    %c0_69 = arith.constant 0 : index
    %c0_70 = arith.constant 0 : index
    %166 = vector.load %arg16[%c0_68, %c0_69, %c0_70] : memref<2x8x16xf32, #tpu.memory_space<vmem>>, vector<2x8x16xf32>
    %cst_71 = arith.constant dense<0.000000e+00> : vector<2x16xf32>
    %167 = vector.multi_reduction <add>, %166, %cst_71 [1] : vector<2x8x16xf32> to vector<2x16xf32>
    %168 = arith.addf %165, %167 : vector<2x16xf32>
    %c0_72 = arith.constant 0 : index
    %c0_73 = arith.constant 0 : index
    %169 = vector.load %arg18[%c0_72, %c0_73] : memref<2x16xf32, #tpu.memory_space<vmem>>, vector<2x16xf32>
    tpu.vector_store %arg18[%c0_72, %c0_73], %168 {strides = array<i32>} : memref<2x16xf32, #tpu.memory_space<vmem>>, vector<2x16xf32>,
    %c0_i32_74 = arith.constant 0 : i32
    %170 = arith.cmpi eq, %arg0, %c0_i32_74 : i32
    %171 = arith.extui %170 : i1 to i32
    %c0_i32_75 = arith.constant 0 : i32
    %172 = arith.cmpi ne, %171, %c0_i32_75 : i32
    scf.if %172 {
      %c0_76 = arith.constant 0 : index
      %c0_77 = arith.constant 0 : index
      %173 = vector.load %arg17[%c0_76, %c0_77] : memref<2x16xf32, #tpu.memory_space<vmem>>, vector<2x16xf32>
      %c0_78 = arith.constant 0 : index
      %c0_79 = arith.constant 0 : index
      %174 = vector.load %arg18[%c0_78, %c0_79] : memref<2x16xf32, #tpu.memory_space<vmem>>, vector<2x16xf32>
      %175 = tpu.concatenate %173, %174 in 1 : vector<2x16xf32>, vector<2x16xf32> -> vector<2x32xf32>
      %176 = tpu.concatenate %175, %175 in 1 : vector<2x32xf32>, vector<2x32xf32> -> vector<2x64xf32>
      %c0_80 = arith.constant 0 : index
      %c0_81 = arith.constant 0 : index
      %177 = vector.load %arg8[%c0_80, %c0_81] : memref<64x16xf32, #tpu.memory_space<vmem>>, vector<64x16xf32>
      %cst_82 = arith.constant dense<0.000000e+00> : vector<2x16xf32>
      %178 = tpu.matmul %176, %177, %cst_82 {dimension_numbers = #tpu.dot_dimension_numbers<[1], [0], [0], [1], [0, 0, 1, 1], [], []>} : vector<2x64xf32>, vector<64x16xf32>, vector<2x16xf32> -> vector<2x16xf32>
      %c0_83 = arith.constant 0 : index
      %c0_84 = arith.constant 0 : index
      %179 = vector.load %arg9[%c0_83, %c0_84] : memref<1x16xf32, #tpu.memory_space<vmem>>, vector<1x16xf32>
      %180 = vector.broadcast %179 : vector<1x16xf32> to vector<2x16xf32>
      %181 = arith.addf %178, %180 : vector<2x16xf32>
      %cst_85 = arith.constant 0.000000e+00 : f32
      %182 = vector.broadcast %cst_85 : f32 to vector<2x16xf32>
      %183 = arith.maximumf %181, %182 : vector<2x16xf32>
      %c0_86 = arith.constant 0 : index
      %c0_87 = arith.constant 0 : index
      %184 = vector.load %arg10[%c0_86, %c0_87] : memref<16x4xf32, #tpu.memory_space<vmem>>, vector<16x4xf32>
      %cst_88 = arith.constant dense<0.000000e+00> : vector<2x4xf32>
      %185 = tpu.matmul %183, %184, %cst_88 {dimension_numbers = #tpu.dot_dimension_numbers<[1], [0], [0], [1], [0, 0, 1, 1], [], []>} : vector<2x16xf32>, vector<16x4xf32>, vector<2x4xf32> -> vector<2x4xf32>
      %c0_89 = arith.constant 0 : index
      %c0_90 = arith.constant 0 : index
      %186 = vector.load %arg11[%c0_89, %c0_90] : memref<1x4xf32, #tpu.memory_space<vmem>>, vector<1x4xf32>
      %187 = vector.broadcast %186 : vector<1x4xf32> to vector<2x4xf32>
      %188 = arith.addf %185, %187 : vector<2x4xf32>
      %c0_91 = arith.constant 0 : index
      %c0_92 = arith.constant 0 : index
      %189 = vector.load %arg12[%c0_91, %c0_92] : memref<2x4xf32, #tpu.memory_space<vmem>>, vector<2x4xf32>
      tpu.vector_store %arg12[%c0_91, %c0_92], %188 {strides = array<i32>} : memref<2x4xf32, #tpu.memory_space<vmem>>, vector<2x4xf32>,
    } else {
    }
    return
  }
  func.func @transform_0(%arg0: i32) -> (i32, i32, i32) {
    %c0_i32 = arith.constant 0 : i32
    %c0_i32_0 = arith.constant 0 : i32
    %c0_i32_1 = arith.constant 0 : i32
    return %c0_i32, %arg0, %c0_i32_0 : i32, i32, i32
  }
  func.func @transform_1(%arg0: i32) -> (i32, i32) {
    %c0_i32 = arith.constant 0 : i32
    %c0_i32_0 = arith.constant 0 : i32
    %c0_i32_1 = arith.constant 0 : i32
    return %c0_i32, %c0_i32_0 : i32, i32
  }
  func.func @transform_2(%arg0: i32) -> (i32, i32) {
    %c0_i32 = arith.constant 0 : i32
    %c0_i32_0 = arith.constant 0 : i32
    %c0_i32_1 = arith.constant 0 : i32
    return %c0_i32, %c0_i32_0 : i32, i32
  }
  func.func @transform_3(%arg0: i32) -> (i32, i32) {
    %c0_i32 = arith.constant 0 : i32
    %c0_i32_0 = arith.constant 0 : i32
    %c0_i32_1 = arith.constant 0 : i32
    return %c0_i32, %c0_i32_0 : i32, i32
  }
  func.func @transform_4(%arg0: i32) -> (i32, i32) {
    %c0_i32 = arith.constant 0 : i32
    %c0_i32_0 = arith.constant 0 : i32
    %c0_i32_1 = arith.constant 0 : i32
    return %c0_i32, %c0_i32_0 : i32, i32
  }
  func.func @transform_5(%arg0: i32) -> (i32, i32) {
    %c0_i32 = arith.constant 0 : i32
    %c0_i32_0 = arith.constant 0 : i32
    %c0_i32_1 = arith.constant 0 : i32
    return %c0_i32, %c0_i32_0 : i32, i32
  }
  func.func @transform_6(%arg0: i32) -> (i32, i32) {
    %c0_i32 = arith.constant 0 : i32
    %c0_i32_0 = arith.constant 0 : i32
    %c0_i32_1 = arith.constant 0 : i32
    return %c0_i32, %c0_i32_0 : i32, i32
  }
  func.func @transform_7(%arg0: i32) -> (i32, i32) {
    %c0_i32 = arith.constant 0 : i32
    %c0_i32_0 = arith.constant 0 : i32
    %c0_i32_1 = arith.constant 0 : i32
    return %c0_i32, %c0_i32_0 : i32, i32
  }
  func.func @transform_8(%arg0: i32) -> (i32, i32) {
    %c0_i32 = arith.constant 0 : i32
    %c0_i32_0 = arith.constant 0 : i32
    %c0_i32_1 = arith.constant 0 : i32
    return %c0_i32, %c0_i32_0 : i32, i32
  }
  func.func @transform_9(%arg0: i32) -> (i32, i32) {
    %c0_i32 = arith.constant 0 : i32
    %c0_i32_0 = arith.constant 0 : i32
    %c0_i32_1 = arith.constant 0 : i32
    return %c0_i32, %c0_i32_0 : i32, i32
  }
  func.func @transform_10(%arg0: i32) -> (i32, i32) {
    %c0_i32 = arith.constant 0 : i32
    %c0_i32_0 = arith.constant 0 : i32
    %c0_i32_1 = arith.constant 0 : i32
    return %c0_i32, %c0_i32_0 : i32, i32
  }
  func.func @transform_11(%arg0: i32) -> (i32, i32) {
    %c0_i32 = arith.constant 0 : i32
    %c0_i32_0 = arith.constant 0 : i32
    %c0_i32_1 = arith.constant 0 : i32
    return %c0_i32, %c0_i32_0 : i32, i32
  }
}

</mosaic_0001>

<llo_original>
// kernel: tpu_custom_call.1
$region0: #{tpu_custom_call.1}
  #allocation0 [shape = 'u32[]', space=smem, size = 0x4, offset = 0x4, fixed_abs, tag = 'smem constant byte address 0x4 - core index']
  #allocation1 [shape = 'u32[144,128]{1,0:T(1,128)}', space=vmem, size = 0x12000, scoped, tag = 'internal scratch']
  #allocation2 [shape = 'f32[2,8,64]{2,1,0:T(8,128)}', space=vmem, size = 0x2000, scoped, tag = 'scratch operand']
  #allocation3 [shape = 'f32[2,8,64]{2,1,0:T(8,128)}', space=vmem, size = 0x2000, scoped, tag = 'scratch operand']
  #allocation4 [shape = 'f32[2,8,16]{2,1,0:T(8,128)}', space=vmem, size = 0x2000, scoped, tag = 'scratch operand']
  #allocation5 [shape = 'f32[2,8,16]{2,1,0:T(8,128)}', space=vmem, size = 0x2000, scoped, tag = 'scratch operand']
  #allocation6 [shape = 'f32[2,16]{1,0:T(2,128)}', space=vmem, size = 0x400, scoped, tag = 'scratch operand']
  #allocation7 [shape = 'f32[2,16]{1,0:T(2,128)}', space=vmem, size = 0x400, scoped, tag = 'scratch operand']
  %s0 = inlined_call_operand.vmem [shape: f32[2,8,32], index: 0, kind: input, shape index: {}]
  %s1 = inlined_call_operand.vmem [shape: f32[32,64], index: 1, kind: input, shape index: {}]
  %s2 = inlined_call_operand.vmem [shape: f32[32,64], index: 2, kind: input, shape index: {}]
  %s3 = inlined_call_operand.vmem [shape: f32[1,64], index: 3, kind: input, shape index: {}]
  %s4 = inlined_call_operand.vmem [shape: f32[1,64], index: 4, kind: input, shape index: {}]
  %s5 = inlined_call_operand.vmem [shape: f32[16,64], index: 5, kind: input, shape index: {}]
  %s6 = inlined_call_operand.hbm [shape: f32[16,64], index: 6, kind: input, shape index: {}]
  %s7 = inlined_call_operand.vmem [shape: f32[64,16], index: 7, kind: input, shape index: {}]
  %s8 = inlined_call_operand.vmem [shape: f32[1,16], index: 8, kind: input, shape index: {}]
  %s9 = inlined_call_operand.vmem [shape: f32[16,4], index: 9, kind: input, shape index: {}]
  %s10 = inlined_call_operand.vmem [shape: f32[1,4], index: 10, kind: input, shape index: {}]
  %s11 = inlined_call_operand.hbm [shape: f32[2,4], index: 11, kind: output, shape index: {}]
  %s12 = sld [smem:[#allocation0]]
  $region66: #{tpu_custom_call.1} parent=0
    _
  %s14 = ssub.s32 1, %s12
  %s15 = scalar_select 0, %s14, %s12
  $region1: #{tpu_custom_call.1} parent=0
    #allocation8 [shape = 'u8[8192]{0}', space=vmem, size = 0x2000, scoped, tag = 'input window, operand 6, single buffered']
    #allocation9 [shape = 's32[1]{0}', space=sflag, size = 0x4, scoped, tag = 'scoped memory for tpu_custom_call.1']
    #allocation10 [shape = 's32[1]{0}', space=sflag, size = 0x4, scoped, tag = 'scoped memory for tpu_custom_call.1']
    #allocation11 [shape = 'u8[1024]{0}', space=vmem, size = 0x400, scoped, tag = 'output window, operand 0, single buffered']
    %16 = vsyncpa [#allocation9], 0
    %17 = vsyncpa [#allocation10], 0
    // Predicated region
    $region2: #{tpu_custom_call.1} parent=1 // pred_check
      _
    $region3: #{tpu_custom_call.1} parent=1 // pred_check_branch
      %19 = sbr.rel (0) target = $region5
    $region4: #{tpu_custom_call.1} parent=1 // pred_region
      _
    $region5: #{tpu_custom_call.1} parent=1 // pred_fallthru
      _
    // Predicated region
    $region6: #{tpu_custom_call.1} parent=1 // pred_check
      _
    $region7: #{tpu_custom_call.1} parent=1 // pred_check_branch
      %21 = sbr.rel (0) target = $region9
    $region8: #{tpu_custom_call.1} parent=1 // pred_region
      _
    $region9: #{tpu_custom_call.1} parent=1 // pred_fallthru
      _
    // Predicated region
    $region10: #{tpu_custom_call.1} parent=1 // pred_check
      _
    $region11: #{tpu_custom_call.1} parent=1 // pred_check_branch
      %23 = sbr.rel (0) target = $region13
    $region12: #{tpu_custom_call.1} parent=1 // pred_region
      _
    $region13: #{tpu_custom_call.1} parent=1 // pred_fallthru
      _
    // Predicated region
    $region14: #{tpu_custom_call.1} parent=1 // pred_check
      _
    $region15: #{tpu_custom_call.1} parent=1 // pred_check_branch
      %25 = sbr.rel (0) target = $region17
    $region16: #{tpu_custom_call.1} parent=1 // pred_region
      _
    $region17: #{tpu_custom_call.1} parent=1 // pred_fallthru
      _
    // Predicated region
    $region18: #{tpu_custom_call.1} parent=1 // pred_check
      _
    $region19: #{tpu_custom_call.1} parent=1 // pred_check_branch
      %27 = sbr.rel (0) target = $region21
    $region20: #{tpu_custom_call.1} parent=1 // pred_region
      _
    $region21: #{tpu_custom_call.1} parent=1 // pred_fallthru
      _
    // Predicated region
    $region22: #{tpu_custom_call.1} parent=1 // pred_check
      _
    $region23: #{tpu_custom_call.1} parent=1 // pred_check_branch
      %29 = sbr.rel (0) target = $region25
    $region24: #{tpu_custom_call.1} parent=1 // pred_region
      _
    $region25: #{tpu_custom_call.1} parent=1 // pred_fallthru
      _
    // Predicated region
    $region26: #{tpu_custom_call.1} parent=1 // pred_check
      _
    $region27: #{tpu_custom_call.1} parent=1 // pred_check_branch
      %31 = sbr.rel (0) target = $region29
    $region28: #{tpu_custom_call.1} parent=1 // pred_region
      %s33 = ssub.s32 256, 256
      %34 = vsyncadd [#allocation9], %s33
      %s35 = sshll.u32 [#allocation8], 4
      %s36 = int_to_ptr.vmem [resolvable:$true] %s35
      %41 = dma.hbm_to_vmem [thread:$0]  %s6, 256, %s36, [#allocation9], 128, 128, 8
    $region29: #{tpu_custom_call.1} parent=1 // pred_fallthru
      _
    // Predicated region
    $region30: #{tpu_custom_call.1} parent=1 // pred_check
      _
    $region31: #{tpu_custom_call.1} parent=1 // pred_check_branch
      %43 = sbr.rel (0) target = $region33
    $region32: #{tpu_custom_call.1} parent=1 // pred_region
      _
    $region33: #{tpu_custom_call.1} parent=1 // pred_fallthru
      _
    // Predicated region
    $region34: #{tpu_custom_call.1} parent=1 // pred_check
      _
    $region35: #{tpu_custom_call.1} parent=1 // pred_check_branch
      %45 = sbr.rel (0) target = $region37
    $region36: #{tpu_custom_call.1} parent=1 // pred_region
      _
    $region37: #{tpu_custom_call.1} parent=1 // pred_fallthru
      _
    // Predicated region
    $region38: #{tpu_custom_call.1} parent=1 // pred_check
      _
    $region39: #{tpu_custom_call.1} parent=1 // pred_check_branch
      %47 = sbr.rel (0) target = $region41
    $region40: #{tpu_custom_call.1} parent=1 // pred_region
      _
    $region41: #{tpu_custom_call.1} parent=1 // pred_fallthru
      _
    // Predicated region
    $region42: #{tpu_custom_call.1} parent=1 // pred_check
      _
    $region43: #{tpu_custom_call.1} parent=1 // pred_check_branch
      %49 = sbr.rel (0) target = $region45
    $region44: #{tpu_custom_call.1} parent=1 // pred_region
      _
    $region45: #{tpu_custom_call.1} parent=1 // pred_fallthru
      _
    // Predicated region
    $region46: #{tpu_custom_call.1} parent=1 // pred_check
      _
    $region47: #{tpu_custom_call.1} parent=1 // pred_check_branch
      %51 = sbr.rel (0) target = $region49
    $region48: #{tpu_custom_call.1} parent=1 // pred_region
      %52 = dma.done [#allocation9], 256
    $region49: #{tpu_custom_call.1} parent=1 // pred_fallthru
      _
    %p53 = scmp.eq.s32.totalorder 0, 0
    // Predicated region
    $region50: #{tpu_custom_call.1} parent=1 // pred_check
      %p54 = pneg %p53
    $region51: #{tpu_custom_call.1} parent=1 // pred_check_branch
      %56 = sbr.rel (%p54) target = $region53
    $region52: #{tpu_custom_call.1} parent=1 // pred_region
      %vm57 = vcmask 123904
      %58 = vst.msk [vmem:[#allocation6] sm:$0x3] %vm57, 0.0
      %59 = vst.msk [vmem:[#allocation7] sm:$0x3] %vm57, 0.0
    $region53: #{tpu_custom_call.1} parent=1 // pred_fallthru
      _
    %v60 = vld [vmem:[%s0] sm:$0xff]
    %v61 = vld [vmem:[%s0 + $0x8] sm:$0xff]
    %v62 = vld [vmem:[%s1] sm:$0xff]
    %v63 = vld [vmem:[%s1 + $0x8] sm:$0xff]
    %v64 = vld [vmem:[%s1 + $0x10] sm:$0xff]
    %v65 = vld [vmem:[%s1 + $0x18] sm:$0xff]
    %v66 = vld [vmem:[%s3] sm:$0x1]
    %v68 = vlaneseq
    %v69 = vshrl.u32 %v68, 7
    %v70 = vsub.s32 0, %v69
    %v71 = vrot.slane %v66, %v70
    %vm73 = vcmask 261120
    %v75 = vsel %vm73, %v60, 0
    %v78 = vsel %vm73, %v61, 0
    %80 = vmatprep.subr.mxu0 0.0
    %81 = vmatpush1.msra.mxu0 %v62
    %82 = vmatprep.subr.mxu0 0.0
    %83 = vmatpush1.msra.mxu0 %v63
    %84 = vmatprep.subr.mxu0 0.0
    %85 = vmatpush1.msra.mxu0 %v64
    %86 = vmatprep.subr.mxu0 0.0
    %87 = vmatpush1.msra.mxu0 %v65
    %88 = vmatprep.subr.mxu0 0.0
    %89 = vmatpush1.msra.mxu0 0.0
    %90 = vmatprep.subr.mxu0 0.0
    %91 = vmatpush1.msra.mxu0 0.0
    %92 = vmatprep.subr.mxu0 0.0
    %93 = vmatpush1.msra.mxu0 0.0
    %94 = vmatprep.subr.mxu0 0.0
    %95 = vmatpush1.msra.mxu0 0.0
    %96 = vmatprep.subr.mxu0 0.0
    %97 = vmatpush1.msra.mxu0 0.0
    %98 = vmatprep.subr.mxu0 0.0
    %99 = vmatpush1.msra.mxu0 0.0
    %100 = vmatprep.subr.mxu0 0.0
    %101 = vmatpush1.msra.mxu0 0.0
    %102 = vmatprep.subr.mxu0 0.0
    %103 = vmatpush1.msra.mxu0 0.0
    %104 = vmatprep.subr.mxu0 0.0
    %105 = vmatpush1.msra.mxu0 0.0
    %106 = vmatprep.subr.mxu0 0.0
    %107 = vmatpush1.msra.mxu0 0.0
    %108 = vmatprep.subr.mxu0 0.0
    %109 = vmatpush1.msra.mxu0 0.0
    %110 = vmatprep.subr.mxu0 0.0
    %111 = vmatpush1.msra.mxu0 0.0
    %112 = vmatprep.subr.mxu0 0.0
    %113 = vmatpush1.msra.mxu0 0.0
    %114 = vmatprep.subr.mxu0 0.0
    %115 = vmatpush1.msra.mxu0 0.0
    %116 = vmatprep.subr.mxu0 0.0
    %117 = vmatpush1.msra.mxu0 0.0
    %118 = vmatprep.subr.mxu0 0.0
    %119 = vmatpush1.msra.mxu0 0.0
    %120 = vmatprep.subr.mxu0 0.0
    %121 = vmatpush1.msra.mxu0 0.0
    %122 = vmatprep.subr.mxu0 0.0
    %123 = vmatpush1.msra.mxu0 0.0
    %124 = vmatprep.subr.mxu0 0.0
    %125 = vmatpush1.msra.mxu0 0.0
    %126 = vmatprep.subr.mxu0 0.0
    %127 = vmatpush1.msra.mxu0 0.0
    %128 = vmatprep.subr.mxu0 0.0
    %129 = vmatpush1.msra.mxu0 0.0
    %130 = vmatprep.subr.mxu0 0.0
    %131 = vmatpush1.msra.mxu0 0.0
    %132 = vmatprep.subr.mxu0 0.0
    %133 = vmatpush1.msra.mxu0 0.0
    %134 = vmatprep.subr.mxu0 0.0
    %135 = vmatpush1.msra.mxu0 0.0
    %136 = vmatprep.subr.mxu0 0.0
    %137 = vmatpush1.msra.mxu0 0.0
    %138 = vmatprep.subr.mxu0 0.0
    %139 = vmatpush1.msra.mxu0 0.0
    %140 = vmatprep.subr.mxu0 0.0
    %141 = vmatpush1.msra.mxu0 0.0
    %142 = vmatprep.subr.mxu0 0.0
    %143 = vmatpush1.msra.mxu0 0.0
    %144 = vmatprep.mubr.f32.mxu0 0.0
    %145 = vmatmul.mubr.f32.gmra.mrb[0].mxu0 %v75
    %v146 = vpop.f32.mrb[0].mxu0
    %v147 = vadd.f32 %v71, %v146
    %v148 = vpop.f32.mrb[0].mxu0
    %149 = vmatprep.mubr.f32.mxu0 0.0
    %150 = vmatmul.mubr.f32.gmra.mrb[0].mxu0 %v78
    %v151 = vpop.f32.mrb[0].mxu0
    %v152 = vadd.f32 %v71, %v151
    %v153 = vpop.f32.mrb[0].mxu0
    %154 = vdwg.mxu0
    %vm155 = vcmask 523264
    %156 = vst.msk [vmem:[#allocation2] sm:$0xff] %vm155, %v147
    %157 = vst.msk [vmem:[#allocation2 + $0x8] sm:$0xff] %vm155, %v152
    %v158 = vld [vmem:[%s2] sm:$0xff]
    %v159 = vld [vmem:[%s2 + $0x8] sm:$0xff]
    %v160 = vld [vmem:[%s2 + $0x10] sm:$0xff]
    %v161 = vld [vmem:[%s2 + $0x18] sm:$0xff]
    %v162 = vld [vmem:[%s4] sm:$0x1]
    %v164 = vlaneseq
    %v165 = vshrl.u32 %v164, 7
    %v166 = vsub.s32 0, %v165
    %v167 = vrot.slane %v162, %v166
    %169 = vmatprep.subr.mxu0 0.0
    %170 = vmatpush1.msra.mxu0 %v158
    %171 = vmatprep.subr.mxu0 0.0
    %172 = vmatpush1.msra.mxu0 %v159
    %173 = vmatprep.subr.mxu0 0.0
    %174 = vmatpush1.msra.mxu0 %v160
    %175 = vmatprep.subr.mxu0 0.0
    %176 = vmatpush1.msra.mxu0 %v161
    %177 = vmatprep.subr.mxu0 0.0
    %178 = vmatpush1.msra.mxu0 0.0
    %179 = vmatprep.subr.mxu0 0.0
    %180 = vmatpush1.msra.mxu0 0.0
    %181 = vmatprep.subr.mxu0 0.0
    %182 = vmatpush1.msra.mxu0 0.0
    %183 = vmatprep.subr.mxu0 0.0
    %184 = vmatpush1.msra.mxu0 0.0
    %185 = vmatprep.subr.mxu0 0.0
    %186 = vmatpush1.msra.mxu0 0.0
    %187 = vmatprep.subr.mxu0 0.0
    %188 = vmatpush1.msra.mxu0 0.0
    %189 = vmatprep.subr.mxu0 0.0
    %190 = vmatpush1.msra.mxu0 0.0
    %191 = vmatprep.subr.mxu0 0.0
    %192 = vmatpush1.msra.mxu0 0.0
    %193 = vmatprep.subr.mxu0 0.0
    %194 = vmatpush1.msra.mxu0 0.0
    %195 = vmatprep.subr.mxu0 0.0
    %196 = vmatpush1.msra.mxu0 0.0
    %197 = vmatprep.subr.mxu0 0.0
    %198 = vmatpush1.msra.mxu0 0.0
    %199 = vmatprep.subr.mxu0 0.0
    %200 = vmatpush1.msra.mxu0 0.0
    %201 = vmatprep.subr.mxu0 0.0
    %202 = vmatpush1.msra.mxu0 0.0
    %203 = vmatprep.subr.mxu0 0.0
    %204 = vmatpush1.msra.mxu0 0.0
    %205 = vmatprep.subr.mxu0 0.0
    %206 = vmatpush1.msra.mxu0 0.0
    %207 = vmatprep.subr.mxu0 0.0
    %208 = vmatpush1.msra.mxu0 0.0
    %209 = vmatprep.subr.mxu0 0.0
    %210 = vmatpush1.msra.mxu0 0.0
    %211 = vmatprep.subr.mxu0 0.0
    %212 = vmatpush1.msra.mxu0 0.0
    %213 = vmatprep.subr.mxu0 0.0
    %214 = vmatpush1.msra.mxu0 0.0
    %215 = vmatprep.subr.mxu0 0.0
    %216 = vmatpush1.msra.mxu0 0.0
    %217 = vmatprep.subr.mxu0 0.0
    %218 = vmatpush1.msra.mxu0 0.0
    %219 = vmatprep.subr.mxu0 0.0
    %220 = vmatpush1.msra.mxu0 0.0
    %221 = vmatprep.subr.mxu0 0.0
    %222 = vmatpush1.msra.mxu0 0.0
    %223 = vmatprep.subr.mxu0 0.0
    %224 = vmatpush1.msra.mxu0 0.0
    %225 = vmatprep.subr.mxu0 0.0
    %226 = vmatpush1.msra.mxu0 0.0
    %227 = vmatprep.subr.mxu0 0.0
    %228 = vmatpush1.msra.mxu0 0.0
    %229 = vmatprep.subr.mxu0 0.0
    %230 = vmatpush1.msra.mxu0 0.0
    %231 = vmatprep.subr.mxu0 0.0
    %232 = vmatpush1.msra.mxu0 0.0
    %233 = vmatprep.mubr.f32.mxu0 0.0
    %234 = vmatmul.mubr.f32.gmra.mrb[0].mxu0 %v75
    %v235 = vpop.f32.mrb[0].mxu0
    %v236 = vadd.f32 %v167, %v235
    %v237 = vpop.f32.mrb[0].mxu0
    %238 = vmatprep.mubr.f32.mxu0 0.0
    %239 = vmatmul.mubr.f32.gmra.mrb[0].mxu0 %v78
    %v240 = vpop.f32.mrb[0].mxu0
    %v241 = vadd.f32 %v167, %v240
    %v242 = vpop.f32.mrb[0].mxu0
    %243 = vdwg.mxu0
    %244 = vst.msk [vmem:[#allocation3] sm:$0xff] %vm155, %v236
    %245 = vst.msk [vmem:[#allocation3 + $0x8] sm:$0xff] %vm155, %v241
    %v246 = vld [vmem:[%s5] sm:$0xff]
    %v247 = vld [vmem:[%s5 + $0x8] sm:$0xff]
    %v248 = vld [vmem:[#allocation8] sm:$0xff]
    %v249 = vld [vmem:[#allocation8 + $0x8] sm:$0xff]
    %v250 = vld [vmem:[#allocation2] sm:$0xff]
    %vm251 = vcmask 130048
    %v253 = vsel %vm251, 0.0, 0
    %255 = vmatprep.subr.mxu0 0.0
    %256 = vmatpush1.msra.mxu0 %v246
    %257 = vmatprep.subr.mxu0 0.0
    %258 = vmatpush1.msra.mxu0 %v247
    %259 = vmatprep.subr.mxu0 0.0
    %260 = vmatpush1.msra.mxu0 0.0
    %261 = vmatprep.subr.mxu0 0.0
    %262 = vmatpush1.msra.mxu0 0.0
    %263 = vmatprep.subr.mxu0 0.0
    %264 = vmatpush1.msra.mxu0 0.0
    %265 = vmatprep.subr.mxu0 0.0
    %266 = vmatpush1.msra.mxu0 0.0
    %267 = vmatprep.subr.mxu0 0.0
    %268 = vmatpush1.msra.mxu0 0.0
    %269 = vmatprep.subr.mxu0 0.0
    %270 = vmatpush1.msra.mxu0 0.0
    %271 = vmatprep.subr.mxu0 0.0
    %272 = vmatpush1.msra.mxu0 0.0
    %273 = vmatprep.subr.mxu0 0.0
    %274 = vmatpush1.msra.mxu0 0.0
    %275 = vmatprep.subr.mxu0 0.0
    %276 = vmatpush1.msra.mxu0 0.0
    %277 = vmatprep.subr.mxu0 0.0
    %278 = vmatpush1.msra.mxu0 0.0
    %279 = vmatprep.subr.mxu0 0.0
    %280 = vmatpush1.msra.mxu0 0.0
    %281 = vmatprep.subr.mxu0 0.0
    %282 = vmatpush1.msra.mxu0 0.0
    %283 = vmatprep.subr.mxu0 0.0
    %284 = vmatpush1.msra.mxu0 0.0
    %285 = vmatprep.subr.mxu0 0.0
    %286 = vmatpush1.msra.mxu0 0.0
    %287 = vmatprep.subr.mxu0 0.0
    %288 = vmatpush1.msra.mxu0 0.0
    %289 = vmatprep.subr.mxu0 0.0
    %290 = vmatpush1.msra.mxu0 0.0
    %291 = vmatprep.subr.mxu0 0.0
    %292 = vmatpush1.msra.mxu0 0.0
    %293 = vmatprep.subr.mxu0 0.0
    %294 = vmatpush1.msra.mxu0 0.0
    %295 = vmatprep.subr.mxu0 0.0
    %296 = vmatpush1.msra.mxu0 0.0
    %297 = vmatprep.subr.mxu0 0.0
    %298 = vmatpush1.msra.mxu0 0.0
    %299 = vmatprep.subr.mxu0 0.0
    %300 = vmatpush1.msra.mxu0 0.0
    %301 = vmatprep.subr.mxu0 0.0
    %302 = vmatpush1.msra.mxu0 0.0
    %303 = vmatprep.subr.mxu0 0.0
    %304 = vmatpush1.msra.mxu0 0.0
    %305 = vmatprep.subr.mxu0 0.0
    %306 = vmatpush1.msra.mxu0 0.0
    %307 = vmatprep.subr.mxu0 0.0
    %308 = vmatpush1.msra.mxu0 0.0
    %309 = vmatprep.subr.mxu0 0.0
    %310 = vmatpush1.msra.mxu0 0.0
    %311 = vmatprep.subr.mxu0 0.0
    %312 = vmatpush1.msra.mxu0 0.0
    %313 = vmatprep.subr.mxu0 0.0
    %314 = vmatpush1.msra.mxu0 0.0
    %315 = vmatprep.subr.mxu0 0.0
    %316 = vmatpush1.msra.mxu0 0.0
    %317 = vmatprep.subr.mxu0 0.0
    %318 = vmatpush1.msra.mxu0 0.0
    %319 = vmatprep.mubr.f32.mxu0 0.0
    %320 = vmatmul.mubr.f32.gmra.mrb[0].mxu0 %v253
    %v321 = vpop.f32.mrb[0].mxu0
    %v322 = vadd.f32 0.0, %v321
    %v323 = vpop.f32.mrb[0].mxu0
    %324 = vdwg.mxu0
    %v325 = vadd.f32 %v250, %v322
    %v326 = vxor.u32 %v325, 2147483648
    %v327 = vmul.f32 %v326, 1.442695
    %v328 = vpow.pop %v327
    %v329 = vadd.f32 %v328, 1.0
    %v330 = vrcp.pop %v329
    %v331 = vmul.f32 1.0, %v330
    %v332 = vtanh.pop %v325
    %v333 = vmul.f32 %v331, 0.0
    %335 = vrot.lane.b32.xlu0 %v332, 96
    %v336 = vpop.permute.xlu0 %335
    %v338 = vmul.f32 %v331, %v336
    %340 = vrot.lane.b32.xlu0 %v338, 16
    %v341 = vpop.permute.xlu0 %340
    %v343 = vadd.f32 %v333, %v341
    %v344 = vtanh.pop %v343
    %346 = vrot.lane.b32.xlu0 %v344, 32
    %v347 = vpop.permute.xlu0 %346
    %v349 = vmul.f32 %v331, %v347
    %s350 = scalar_lea.vmem [#allocation3], 8
    %v351 = vld [vmem:[%s350] sm:$0xff]
    %352 = vmatprep.subr.mxu0 0.0
    %353 = vmatpush1.msra.mxu0 %v248
    %354 = vmatprep.subr.mxu0 0.0
    %355 = vmatpush1.msra.mxu0 %v249
    %356 = vmatprep.subr.mxu0 0.0
    %357 = vmatpush1.msra.mxu0 0.0
    %358 = vmatprep.subr.mxu0 0.0
    %359 = vmatpush1.msra.mxu0 0.0
    %360 = vmatprep.subr.mxu0 0.0
    %361 = vmatpush1.msra.mxu0 0.0
    %362 = vmatprep.subr.mxu0 0.0
    %363 = vmatpush1.msra.mxu0 0.0
    %364 = vmatprep.subr.mxu0 0.0
    %365 = vmatpush1.msra.mxu0 0.0
    %366 = vmatprep.subr.mxu0 0.0
    %367 = vmatpush1.msra.mxu0 0.0
    %368 = vmatprep.subr.mxu0 0.0
    %369 = vmatpush1.msra.mxu0 0.0
    %370 = vmatprep.subr.mxu0 0.0
    %371 = vmatpush1.msra.mxu0 0.0
    %372 = vmatprep.subr.mxu0 0.0
    %373 = vmatpush1.msra.mxu0 0.0
    %374 = vmatprep.subr.mxu0 0.0
    %375 = vmatpush1.msra.mxu0 0.0
    %376 = vmatprep.subr.mxu0 0.0
    %377 = vmatpush1.msra.mxu0 0.0
    %378 = vmatprep.subr.mxu0 0.0
    %379 = vmatpush1.msra.mxu0 0.0
    %380 = vmatprep.subr.mxu0 0.0
    %381 = vmatpush1.msra.mxu0 0.0
    %382 = vmatprep.subr.mxu0 0.0
    %383 = vmatpush1.msra.mxu0 0.0
    %384 = vmatprep.subr.mxu0 0.0
    %385 = vmatpush1.msra.mxu0 0.0
    %386 = vmatprep.subr.mxu0 0.0
    %387 = vmatpush1.msra.mxu0 0.0
    %388 = vmatprep.subr.mxu0 0.0
    %389 = vmatpush1.msra.mxu0 0.0
    %390 = vmatprep.subr.mxu0 0.0
    %391 = vmatpush1.msra.mxu0 0.0
    %392 = vmatprep.subr.mxu0 0.0
    %393 = vmatpush1.msra.mxu0 0.0
    %394 = vmatprep.subr.mxu0 0.0
    %395 = vmatpush1.msra.mxu0 0.0
    %396 = vmatprep.subr.mxu0 0.0
    %397 = vmatpush1.msra.mxu0 0.0
    %398 = vmatprep.subr.mxu0 0.0
    %399 = vmatpush1.msra.mxu0 0.0
    %400 = vmatprep.subr.mxu0 0.0
    %401 = vmatpush1.msra.mxu0 0.0
    %402 = vmatprep.subr.mxu0 0.0
    %403 = vmatpush1.msra.mxu0 0.0
    %404 = vmatprep.subr.mxu0 0.0
    %405 = vmatpush1.msra.mxu0 0.0
    %406 = vmatprep.subr.mxu0 0.0
    %407 = vmatpush1.msra.mxu0 0.0
    %408 = vmatprep.subr.mxu0 0.0
    %409 = vmatpush1.msra.mxu0 0.0
    %410 = vmatprep.subr.mxu0 0.0
    %411 = vmatpush1.msra.mxu0 0.0
    %412 = vmatprep.subr.mxu0 0.0
    %413 = vmatpush1.msra.mxu0 0.0
    %414 = vmatprep.subr.mxu0 0.0
    %415 = vmatpush1.msra.mxu0 0.0
    %416 = vmatprep.mubr.f32.mxu0 0.0
    %417 = vmatmul.mubr.f32.gmra.mrb[0].mxu0 %v253
    %v418 = vpop.f32.mrb[0].mxu0
    %v419 = vadd.f32 0.0, %v418
    %v420 = vpop.f32.mrb[0].mxu0
    %421 = vdwg.mxu0
    %v422 = vadd.f32 %v351, %v419
    %v423 = vxor.u32 %v422, 2147483648
    %v424 = vmul.f32 %v423, 1.442695
    %v425 = vpow.pop %v424
    %v426 = vadd.f32 %v425, 1.0
    %v427 = vrcp.pop %v426
    %v428 = vmul.f32 1.0, %v427
    %v429 = vtanh.pop %v422
    %v430 = vmul.f32 %v428, 0.0
    %432 = vrot.lane.b32.xlu0 %v429, 96
    %v433 = vpop.permute.xlu0 %432
    %v435 = vmul.f32 %v428, %v433
    %437 = vrot.lane.b32.xlu0 %v435, 16
    %v438 = vpop.permute.xlu0 %437
    %v440 = vadd.f32 %v430, %v438
    %v441 = vtanh.pop %v440
    %443 = vrot.lane.b32.xlu0 %v441, 32
    %v444 = vpop.permute.xlu0 %443
    %v446 = vmul.f32 %v428, %v444
    %448 = vrot.lane.b32.xlu0 %v349, 80
    %v449 = vpop.permute.xlu0 %448
    %451 = vst.msk [vmem:[#allocation4] sm:$0xff] %vm251, %v449
    %453 = vrot.lane.b32.xlu0 %v446, 80
    %v454 = vpop.permute.xlu0 %453
    %s456 = scalar_lea.vmem [#allocation5], 8
    %457 = vst.msk [vmem:[%s456] sm:$0xff] %vm251, %v454
    %s458 = scalar_lea.vmem [#allocation2], 8
    %v459 = vld [vmem:[%s458] sm:$0xff]
    %v460 = vsel %vm251, %v449, 0
    %462 = vmatprep.subr.mxu0 0.0
    %463 = vmatpush1.msra.mxu0 %v246
    %464 = vmatprep.subr.mxu0 0.0
    %465 = vmatpush1.msra.mxu0 %v247
    %466 = vmatprep.subr.mxu0 0.0
    %467 = vmatpush1.msra.mxu0 0.0
    %468 = vmatprep.subr.mxu0 0.0
    %469 = vmatpush1.msra.mxu0 0.0
    %470 = vmatprep.subr.mxu0 0.0
    %471 = vmatpush1.msra.mxu0 0.0
    %472 = vmatprep.subr.mxu0 0.0
    %473 = vmatpush1.msra.mxu0 0.0
    %474 = vmatprep.subr.mxu0 0.0
    %475 = vmatpush1.msra.mxu0 0.0
    %476 = vmatprep.subr.mxu0 0.0
    %477 = vmatpush1.msra.mxu0 0.0
    %478 = vmatprep.subr.mxu0 0.0
    %479 = vmatpush1.msra.mxu0 0.0
    %480 = vmatprep.subr.mxu0 0.0
    %481 = vmatpush1.msra.mxu0 0.0
    %482 = vmatprep.subr.mxu0 0.0
    %483 = vmatpush1.msra.mxu0 0.0
    %484 = vmatprep.subr.mxu0 0.0
    %485 = vmatpush1.msra.mxu0 0.0
    %486 = vmatprep.subr.mxu0 0.0
    %487 = vmatpush1.msra.mxu0 0.0
    %488 = vmatprep.subr.mxu0 0.0
    %489 = vmatpush1.msra.mxu0 0.0
    %490 = vmatprep.subr.mxu0 0.0
    %491 = vmatpush1.msra.mxu0 0.0
    %492 = vmatprep.subr.mxu0 0.0
    %493 = vmatpush1.msra.mxu0 0.0
    %494 = vmatprep.subr.mxu0 0.0
    %495 = vmatpush1.msra.mxu0 0.0
    %496 = vmatprep.subr.mxu0 0.0
    %497 = vmatpush1.msra.mxu0 0.0
    %498 = vmatprep.subr.mxu0 0.0
    %499 = vmatpush1.msra.mxu0 0.0
    %500 = vmatprep.subr.mxu0 0.0
    %501 = vmatpush1.msra.mxu0 0.0
    %502 = vmatprep.subr.mxu0 0.0
    %503 = vmatpush1.msra.mxu0 0.0
    %504 = vmatprep.subr.mxu0 0.0
    %505 = vmatpush1.msra.mxu0 0.0
    %506 = vmatprep.subr.mxu0 0.0
    %507 = vmatpush1.msra.mxu0 0.0
    %508 = vmatprep.subr.mxu0 0.0
    %509 = vmatpush1.msra.mxu0 0.0
    %510 = vmatprep.subr.mxu0 0.0
    %511 = vmatpush1.msra.mxu0 0.0
    %512 = vmatprep.subr.mxu0 0.0
    %513 = vmatpush1.msra.mxu0 0.0
    %514 = vmatprep.subr.mxu0 0.0
    %515 = vmatpush1.msra.mxu0 0.0
    %516 = vmatprep.subr.mxu0 0.0
    %517 = vmatpush1.msra.mxu0 0.0
    %518 = vmatprep.subr.mxu0 0.0
    %519 = vmatpush1.msra.mxu0 0.0
    %520 = vmatprep.subr.mxu0 0.0
    %521 = vmatpush1.msra.mxu0 0.0
    %522 = vmatprep.subr.mxu0 0.0
    %523 = vmatpush1.msra.mxu0 0.0
    %524 = vmatprep.subr.mxu0 0.0
    %525 = vmatpush1.msra.mxu0 0.0
    %526 = vmatprep.mubr.f32.mxu0 0.0
    %527 = vmatmul.mubr.f32.gmra.mrb[0].mxu0 %v460
    %v528 = vpop.f32.mrb[0].mxu0
    %v529 = vadd.f32 0.0, %v528
    %v530 = vpop.f32.mrb[0].mxu0
    %531 = vdwg.mxu0
    %v532 = vadd.f32 %v459, %v529
    %v533 = vxor.u32 %v532, 2147483648
    %v534 = vmul.f32 %v533, 1.442695
    %v535 = vpow.pop %v534
    %v536 = vadd.f32 %v535, 1.0
    %v537 = vrcp.pop %v536
    %v538 = vmul.f32 1.0, %v537
    %v539 = vtanh.pop %v532
    %v540 = vmul.f32 %v538, %v343
    %542 = vrot.lane.b32.xlu0 %v539, 96
    %v543 = vpop.permute.xlu0 %542
    %v545 = vmul.f32 %v538, %v543
    %547 = vrot.lane.b32.xlu0 %v545, 16
    %v548 = vpop.permute.xlu0 %547
    %v550 = vadd.f32 %v540, %v548
    %v551 = vtanh.pop %v550
    %553 = vrot.lane.b32.xlu0 %v551, 32
    %v554 = vpop.permute.xlu0 %553
    %v556 = vmul.f32 %v538, %v554
    %v557 = vld [vmem:[#allocation3] sm:$0xff]
    %v558 = vsel %vm251, %v454, 0
    %560 = vmatprep.subr.mxu0 0.0
    %561 = vmatpush1.msra.mxu0 %v248
    %562 = vmatprep.subr.mxu0 0.0
    %563 = vmatpush1.msra.mxu0 %v249
    %564 = vmatprep.subr.mxu0 0.0
    %565 = vmatpush1.msra.mxu0 0.0
    %566 = vmatprep.subr.mxu0 0.0
    %567 = vmatpush1.msra.mxu0 0.0
    %568 = vmatprep.subr.mxu0 0.0
    %569 = vmatpush1.msra.mxu0 0.0
    %570 = vmatprep.subr.mxu0 0.0
    %571 = vmatpush1.msra.mxu0 0.0
    %572 = vmatprep.subr.mxu0 0.0
    %573 = vmatpush1.msra.mxu0 0.0
    %574 = vmatprep.subr.mxu0 0.0
    %575 = vmatpush1.msra.mxu0 0.0
    %576 = vmatprep.subr.mxu0 0.0
    %577 = vmatpush1.msra.mxu0 0.0
    %578 = vmatprep.subr.mxu0 0.0
    %579 = vmatpush1.msra.mxu0 0.0
    %580 = vmatprep.subr.mxu0 0.0
    %581 = vmatpush1.msra.mxu0 0.0
    %582 = vmatprep.subr.mxu0 0.0
    %583 = vmatpush1.msra.mxu0 0.0
    %584 = vmatprep.subr.mxu0 0.0
    %585 = vmatpush1.msra.mxu0 0.0
    %586 = vmatprep.subr.mxu0 0.0
    %587 = vmatpush1.msra.mxu0 0.0
    %588 = vmatprep.subr.mxu0 0.0
    %589 = vmatpush1.msra.mxu0 0.0
    %590 = vmatprep.subr.mxu0 0.0
    %591 = vmatpush1.msra.mxu0 0.0
    %592 = vmatprep.subr.mxu0 0.0
    %593 = vmatpush1.msra.mxu0 0.0
    %594 = vmatprep.subr.mxu0 0.0
    %595 = vmatpush1.msra.mxu0 0.0
    %596 = vmatprep.subr.mxu0 0.0
    %597 = vmatpush1.msra.mxu0 0.0
    %598 = vmatprep.subr.mxu0 0.0
    %599 = vmatpush1.msra.mxu0 0.0
    %600 = vmatprep.subr.mxu0 0.0
    %601 = vmatpush1.msra.mxu0 0.0
    %602 = vmatprep.subr.mxu0 0.0
    %603 = vmatpush1.msra.mxu0 0.0
    %604 = vmatprep.subr.mxu0 0.0
    %605 = vmatpush1.msra.mxu0 0.0
    %606 = vmatprep.subr.mxu0 0.0
    %607 = vmatpush1.msra.mxu0 0.0
    %608 = vmatprep.subr.mxu0 0.0
    %609 = vmatpush1.msra.mxu0 0.0
    %610 = vmatprep.subr.mxu0 0.0
    %611 = vmatpush1.msra.mxu0 0.0
    %612 = vmatprep.subr.mxu0 0.0
    %613 = vmatpush1.msra.mxu0 0.0
    %614 = vmatprep.subr.mxu0 0.0
    %615 = vmatpush1.msra.mxu0 0.0
    %616 = vmatprep.subr.mxu0 0.0
    %617 = vmatpush1.msra.mxu0 0.0
    %618 = vmatprep.subr.mxu0 0.0
    %619 = vmatpush1.msra.mxu0 0.0
    %620 = vmatprep.subr.mxu0 0.0
    %621 = vmatpush1.msra.mxu0 0.0
    %622 = vmatprep.subr.mxu0 0.0
    %623 = vmatpush1.msra.mxu0 0.0
    %624 = vmatprep.mubr.f32.mxu0 0.0
    %625 = vmatmul.mubr.f32.gmra.mrb[0].mxu0 %v558
    %v626 = vpop.f32.mrb[0].mxu0
    %v627 = vadd.f32 0.0, %v626
    %v628 = vpop.f32.mrb[0].mxu0
    %629 = vdwg.mxu0
    %v630 = vadd.f32 %v557, %v627
    %v631 = vxor.u32 %v630, 2147483648
    %v632 = vmul.f32 %v631, 1.442695
    %v633 = vpow.pop %v632
    %v634 = vadd.f32 %v633, 1.0
    %v635 = vrcp.pop %v634
    %v636 = vmul.f32 1.0, %v635
    %v637 = vtanh.pop %v630
    %v638 = vmul.f32 %v636, %v440
    %640 = vrot.lane.b32.xlu0 %v637, 96
    %v641 = vpop.permute.xlu0 %640
    %v643 = vmul.f32 %v636, %v641
    %645 = vrot.lane.b32.xlu0 %v643, 16
    %v646 = vpop.permute.xlu0 %645
    %v648 = vadd.f32 %v638, %v646
    %v649 = vtanh.pop %v648
    %651 = vrot.lane.b32.xlu0 %v649, 32
    %v652 = vpop.permute.xlu0 %651
    %v654 = vmul.f32 %v636, %v652
    %656 = vrot.lane.b32.xlu0 %v556, 80
    %v657 = vpop.permute.xlu0 %656
    %s659 = scalar_lea.vmem [#allocation4], 8
    %660 = vst.msk [vmem:[%s659] sm:$0xff] %vm251, %v657
    %662 = vrot.lane.b32.xlu0 %v654, 80
    %v663 = vpop.permute.xlu0 %662
    %665 = vst.msk [vmem:[#allocation5] sm:$0xff] %vm251, %v663
    %v666 = vld [vmem:[#allocation6] sm:$0x3]
    %v667 = vld [vmem:[#allocation4] sm:$0xff]
    %v668 = vld [vmem:[#allocation4 + $0x8] sm:$0xff]
    %v669 = vsel %vm251, %v667, 0.0
    %v670 = vrot.slane %v669, 4
    %v671 = vadd.f32 %v669, %v670
    %v672 = vrot.slane %v671, 2
    %v673 = vadd.f32 %v671, %v672
    %v674 = vrot.slane %v673, 1
    %v675 = vadd.f32 %v673, %v674
    %v676 = vsel %vm251, %v668, 0.0
    %v677 = vrot.slane %v676, 4
    %v678 = vadd.f32 %v676, %v677
    %v679 = vrot.slane %v678, 2
    %v680 = vadd.f32 %v678, %v679
    %v681 = vrot.slane %v680, 1
    %v682 = vadd.f32 %v680, %v681
    %vm685 = vcmask 1041409
    %v686 = vsel %vm685, %v682, %v675
    %v688 = vadd.f32 %v666, %v686
    %vm689 = vcmask 123904
    %690 = vst.msk [vmem:[#allocation6] sm:$0x3] %vm689, %v688
    %v691 = vld [vmem:[#allocation7] sm:$0x3]
    %v692 = vld [vmem:[#allocation5] sm:$0xff]
    %v693 = vld [vmem:[#allocation5 + $0x8] sm:$0xff]
    %v694 = vsel %vm251, %v692, 0.0
    %v695 = vrot.slane %v694, 4
    %v696 = vadd.f32 %v694, %v695
    %v697 = vrot.slane %v696, 2
    %v698 = vadd.f32 %v696, %v697
    %v699 = vrot.slane %v698, 1
    %v700 = vadd.f32 %v698, %v699
    %v701 = vsel %vm251, %v693, 0.0
    %v702 = vrot.slane %v701, 4
    %v703 = vadd.f32 %v701, %v702
    %v704 = vrot.slane %v703, 2
    %v705 = vadd.f32 %v703, %v704
    %v706 = vrot.slane %v705, 1
    %v707 = vadd.f32 %v705, %v706
    %v710 = vsel %vm685, %v707, %v700
    %v712 = vadd.f32 %v691, %v710
    %713 = vst.msk [vmem:[#allocation7] sm:$0x3] %vm689, %v712
    // Predicated region
    $region54: #{tpu_custom_call.1} parent=1 // pred_check
      %p714 = pneg %p53
    $region55: #{tpu_custom_call.1} parent=1 // pred_check_branch
      %716 = sbr.rel (%p714) target = $region57
    $region56: #{tpu_custom_call.1} parent=1 // pred_region
      %v717 = vld [vmem:[#allocation6] sm:$0x3]
      %v718 = vld [vmem:[#allocation7] sm:$0x3]
      %720 = vrot.lane.b32.xlu0 %v718, 16
      %v721 = vpop.permute.xlu0 %720
      %v723 = vsel %vm251, %v717, %v721
      %725 = vrot.lane.b32.xlu0 %v723, 32
      %v726 = vpop.permute.xlu0 %725
      %v728 = vsel %vm73, %v723, %v726
      %v729 = vld [vmem:[%s7] sm:$0xff]
      %v730 = vld [vmem:[%s7 + $0x8] sm:$0xff]
      %v731 = vld [vmem:[%s7 + $0x10] sm:$0xff]
      %v732 = vld [vmem:[%s7 + $0x18] sm:$0xff]
      %v733 = vld [vmem:[%s7 + $0x20] sm:$0xff]
      %v734 = vld [vmem:[%s7 + $0x28] sm:$0xff]
      %v735 = vld [vmem:[%s7 + $0x30] sm:$0xff]
      %v736 = vld [vmem:[%s7 + $0x38] sm:$0xff]
      %v737 = vld [vmem:[%s8] sm:$0x1]
      %v739 = vlaneseq
      %v740 = vshrl.u32 %v739, 7
      %v741 = vsub.s32 0, %v740
      %v742 = vrot.slane %v737, %v741
      %v745 = vsel %vm155, %v728, 0
      %747 = vmatprep.subr.mxu0 0.0
      %748 = vmatpush1.msra.mxu0 %v729
      %749 = vmatprep.subr.mxu0 0.0
      %750 = vmatpush1.msra.mxu0 %v730
      %751 = vmatprep.subr.mxu0 0.0
      %752 = vmatpush1.msra.mxu0 %v731
      %753 = vmatprep.subr.mxu0 0.0
      %754 = vmatpush1.msra.mxu0 %v732
      %755 = vmatprep.subr.mxu0 0.0
      %756 = vmatpush1.msra.mxu0 %v733
      %757 = vmatprep.subr.mxu0 0.0
      %758 = vmatpush1.msra.mxu0 %v734
      %759 = vmatprep.subr.mxu0 0.0
      %760 = vmatpush1.msra.mxu0 %v735
      %761 = vmatprep.subr.mxu0 0.0
      %762 = vmatpush1.msra.mxu0 %v736
      %763 = vmatprep.subr.mxu0 0.0
      %764 = vmatpush1.msra.mxu0 0.0
      %765 = vmatprep.subr.mxu0 0.0
      %766 = vmatpush1.msra.mxu0 0.0
      %767 = vmatprep.subr.mxu0 0.0
      %768 = vmatpush1.msra.mxu0 0.0
      %769 = vmatprep.subr.mxu0 0.0
      %770 = vmatpush1.msra.mxu0 0.0
      %771 = vmatprep.subr.mxu0 0.0
      %772 = vmatpush1.msra.mxu0 0.0
      %773 = vmatprep.subr.mxu0 0.0
      %774 = vmatpush1.msra.mxu0 0.0
      %775 = vmatprep.subr.mxu0 0.0
      %776 = vmatpush1.msra.mxu0 0.0
      %777 = vmatprep.subr.mxu0 0.0
      %778 = vmatpush1.msra.mxu0 0.0
      %779 = vmatprep.subr.mxu0 0.0
      %780 = vmatpush1.msra.mxu0 0.0
      %781 = vmatprep.subr.mxu0 0.0
      %782 = vmatpush1.msra.mxu0 0.0
      %783 = vmatprep.subr.mxu0 0.0
      %784 = vmatpush1.msra.mxu0 0.0
      %785 = vmatprep.subr.mxu0 0.0
      %786 = vmatpush1.msra.mxu0 0.0
      %787 = vmatprep.subr.mxu0 0.0
      %788 = vmatpush1.msra.mxu0 0.0
      %789 = vmatprep.subr.mxu0 0.0
      %790 = vmatpush1.msra.mxu0 0.0
      %791 = vmatprep.subr.mxu0 0.0
      %792 = vmatpush1.msra.mxu0 0.0
      %793 = vmatprep.subr.mxu0 0.0
      %794 = vmatpush1.msra.mxu0 0.0
      %795 = vmatprep.subr.mxu0 0.0
      %796 = vmatpush1.msra.mxu0 0.0
      %797 = vmatprep.subr.mxu0 0.0
      %798 = vmatpush1.msra.mxu0 0.0
      %799 = vmatprep.subr.mxu0 0.0
      %800 = vmatpush1.msra.mxu0 0.0
      %801 = vmatprep.subr.mxu0 0.0
      %802 = vmatpush1.msra.mxu0 0.0
      %803 = vmatprep.subr.mxu0 0.0
      %804 = vmatpush1.msra.mxu0 0.0
      %805 = vmatprep.subr.mxu0 0.0
      %806 = vmatpush1.msra.mxu0 0.0
      %807 = vmatprep.subr.mxu0 0.0
      %808 = vmatpush1.msra.mxu0 0.0
      %809 = vmatprep.subr.mxu0 0.0
      %810 = vmatpush1.msra.mxu0 0.0
      %811 = vmatprep.mubr.f32.mxu0 0.0
      %812 = vmatmul.mubr.f32.gmra.mrb[0].mxu0 %v745
      %v813 = vpop.f32.mrb[0].mxu0
      %v814 = vadd.f32 %v742, %v813
      %v815 = vpop.f32.mrb[0].mxu0
      %816 = vdwg.mxu0
      %v817 = vmax.f32 %v814, 0.0
      %v818 = vld [vmem:[%s9] sm:$0xff]
      %v819 = vld [vmem:[%s9 + $0x8] sm:$0xff]
      %v820 = vld [vmem:[%s10] sm:$0x1]
      %v822 = vlaneseq
      %v823 = vshrl.u32 %v822, 7
      %v824 = vsub.s32 0, %v823
      %v825 = vrot.slane %v820, %v824
      %v828 = vsel %vm251, %v817, 0
      %830 = vmatprep.subr.mxu0 0.0
      %831 = vmatpush1.msra.mxu0 %v818
      %832 = vmatprep.subr.mxu0 0.0
      %833 = vmatpush1.msra.mxu0 %v819
      %834 = vmatprep.subr.mxu0 0.0
      %835 = vmatpush1.msra.mxu0 0.0
      %836 = vmatprep.subr.mxu0 0.0
      %837 = vmatpush1.msra.mxu0 0.0
      %838 = vmatprep.subr.mxu0 0.0
      %839 = vmatpush1.msra.mxu0 0.0
      %840 = vmatprep.subr.mxu0 0.0
      %841 = vmatpush1.msra.mxu0 0.0
      %842 = vmatprep.subr.mxu0 0.0
      %843 = vmatpush1.msra.mxu0 0.0
      %844 = vmatprep.subr.mxu0 0.0
      %845 = vmatpush1.msra.mxu0 0.0
      %846 = vmatprep.subr.mxu0 0.0
      %847 = vmatpush1.msra.mxu0 0.0
      %848 = vmatprep.subr.mxu0 0.0
      %849 = vmatpush1.msra.mxu0 0.0
      %850 = vmatprep.subr.mxu0 0.0
      %851 = vmatpush1.msra.mxu0 0.0
      %852 = vmatprep.subr.mxu0 0.0
      %853 = vmatpush1.msra.mxu0 0.0
      %854 = vmatprep.subr.mxu0 0.0
      %855 = vmatpush1.msra.mxu0 0.0
      %856 = vmatprep.subr.mxu0 0.0
      %857 = vmatpush1.msra.mxu0 0.0
      %858 = vmatprep.subr.mxu0 0.0
      %859 = vmatpush1.msra.mxu0 0.0
      %860 = vmatprep.subr.mxu0 0.0
      %861 = vmatpush1.msra.mxu0 0.0
      %862 = vmatprep.subr.mxu0 0.0
      %863 = vmatpush1.msra.mxu0 0.0
      %864 = vmatprep.subr.mxu0 0.0
      %865 = vmatpush1.msra.mxu0 0.0
      %866 = vmatprep.subr.mxu0 0.0
      %867 = vmatpush1.msra.mxu0 0.0
      %868 = vmatprep.subr.mxu0 0.0
      %869 = vmatpush1.msra.mxu0 0.0
      %870 = vmatprep.subr.mxu0 0.0
      %871 = vmatpush1.msra.mxu0 0.0
      %872 = vmatprep.subr.mxu0 0.0
      %873 = vmatpush1.msra.mxu0 0.0
      %874 = vmatprep.subr.mxu0 0.0
      %875 = vmatpush1.msra.mxu0 0.0
      %876 = vmatprep.subr.mxu0 0.0
      %877 = vmatpush1.msra.mxu0 0.0
      %878 = vmatprep.subr.mxu0 0.0
      %879 = vmatpush1.msra.mxu0 0.0
      %880 = vmatprep.subr.mxu0 0.0
      %881 = vmatpush1.msra.mxu0 0.0
      %882 = vmatprep.subr.mxu0 0.0
      %883 = vmatpush1.msra.mxu0 0.0
      %884 = vmatprep.subr.mxu0 0.0
      %885 = vmatpush1.msra.mxu0 0.0
      %886 = vmatprep.subr.mxu0 0.0
      %887 = vmatpush1.msra.mxu0 0.0
      %888 = vmatprep.subr.mxu0 0.0
      %889 = vmatpush1.msra.mxu0 0.0
      %890 = vmatprep.subr.mxu0 0.0
      %891 = vmatpush1.msra.mxu0 0.0
      %892 = vmatprep.subr.mxu0 0.0
      %893 = vmatpush1.msra.mxu0 0.0
      %894 = vmatprep.mubr.f32.mxu0 0.0
      %895 = vmatmul.mubr.f32.gmra.mrb[0].mxu0 %v828
      %v896 = vpop.f32.mrb[0].mxu0
      %v897 = vadd.f32 %v825, %v896
      %v898 = vpop.f32.mrb[0].mxu0
      %899 = vdwg.mxu0
      %vm900 = vcmask 25600
      %901 = vst.msk [vmem:[#allocation11] sm:$0x3] %vm900, %v897
    $region57: #{tpu_custom_call.1} parent=1 // pred_fallthru
      _
    // Predicated region
    $region58: #{tpu_custom_call.1} parent=1 // pred_check
      _
    $region59: #{tpu_custom_call.1} parent=1 // pred_check_branch
      %903 = sbr.rel (0) target = $region61
    $region60: #{tpu_custom_call.1} parent=1 // pred_region
      %s905 = ssub.s32 32, 32
      %906 = vsyncadd [#allocation10], %s905
      %s908 = sshll.u32 [#allocation11], 4
      %s909 = int_to_ptr.vmem [resolvable:$true] %s908
      %911 = dma.vmem_to_hbm [thread:$0]  %s909, 32, %s11, [#allocation10]
    $region61: #{tpu_custom_call.1} parent=1 // pred_fallthru
      _
    // Predicated region
    $region62: #{tpu_custom_call.1} parent=1 // pred_check
      _
    $region63: #{tpu_custom_call.1} parent=1 // pred_check_branch
      %913 = sbr.rel (0) target = $region65
    $region64: #{tpu_custom_call.1} parent=1 // pred_region
      %914 = dma.done [#allocation10], 32
    $region65: #{tpu_custom_call.1} parent=1 // pred_fallthru
      _
    %915 = vsyncpa [#allocation9], 1
    %916 = vsyncpa [#allocation10], 1

</llo_original>
